<compile_context>
chip_gen: v6e
topology: v6e:2x2x1
jax: 0.10.0
libtpu: 0.0.40
codegen_flags: <defaults>
</compile_context>

<pallas_src>
import numpy as np
import jax
import jax.numpy as jnp
from jax import lax
from jax.experimental import pallas as pl
from jax.experimental.pallas import tpu as pltpu

C_MID = 32            # hidden channels of first Conv2dReLU
KH, KW = 2, 10        # conv kernel size
ADAPT_H, ADAPT_W = 82, 2
BN_EPS = 1e-5


def _round_up(x, m):
    return ((x + m - 1) // m) * m


# --------------------------------------------------------------------------
# Pallas kernel factory: fused forward for B batch elements per grid step
# --------------------------------------------------------------------------
def make_extractor_kernel(B, H1p, H2, NW, OC, use_ph, use_pw):
    """B: samples per step; H1p: padded conv1 height (multiple of 8);
       H2: conv2 output height; NW = W2*Cout; OC = 2*Cout output cols/sample."""
    R = B * H1p

    def kernel(x_ref, m1_ref, b1_ref, m2_ref, b2_ref, *rest):
        idx = 0
        ph_ref = pw_ref = None
        if use_ph:
            ph_ref = rest[idx]; idx += 1
        if use_pw:
            pw_ref = rest[idx]; idx += 1
        o_ref = rest[idx]

        # conv1 (+ BN scale folded, kh fused into K=2*W*Cin), all B samples in
        # one tall bf16 dot with f32 accumulation; bias + ReLU in f32 (VPU).
        a1 = jnp.dot(x_ref[...], m1_ref[...],
                     preferred_element_type=jnp.float32)        # (R, W1*32)
        a1 = jnp.maximum(a1 + b1_ref[...], 0.0).astype(jnp.bfloat16)

        # conv2 (+ AvgPool(1,2) and BN scale folded; kh=0/1 halves side by
        # side).  One dot, then shift the *narrow* kh=1 half by one row.
        p = jnp.dot(a1, m2_ref[...],
                    preferred_element_type=jnp.float32)          # (R, 2*NW)
        a2 = jnp.maximum(p[:R - 1, :NW] + p[1:, NW:] + b2_ref[...], 0.0)

        # Per-sample adaptive pools (skipped when identity) and lane placement
        # into one dense (82, B*OC) output slab.  Sample offsets b*H1p are
        # multiples of 8, so these slices are sublane-aligned.
        for b in range(B):
            blk = a2[b * H1p:b * H1p + H2, :]                    # (H2, NW)
            if use_ph:
                blk = jnp.dot(ph_ref[...], blk.astype(jnp.bfloat16),
                              preferred_element_type=jnp.float32)
            if use_pw:
                blk = jnp.dot(blk.astype(jnp.bfloat16), pw_ref[...],
                              preferred_element_type=jnp.float32)
            o_ref[:, b * OC:(b + 1) * OC] = blk                  # (82, OC)

    return kernel


# --------------------------------------------------------------------------
# Parameter init (deterministic, synthetic)
# --------------------------------------------------------------------------
def init_params(key, cin, cout):
    ks = jax.random.split(key, 10)
    return dict(
        w1=0.1 * jax.random.normal(ks[0], (C_MID, cin, KH, KW), jnp.float32),
        g1=1.0 + 0.1 * jax.random.normal(ks[1], (C_MID,), jnp.float32),
        b1=0.1 * jax.random.normal(ks[2], (C_MID,), jnp.float32),
        rm1=0.1 * jax.random.normal(ks[3], (C_MID,), jnp.float32),
        rv1=jax.random.uniform(ks[4], (C_MID,), jnp.float32, 0.5, 1.5),
        w2=0.1 * jax.random.normal(ks[5], (cout, C_MID, KH, KW), jnp.float32),
        g2=1.0 + 0.1 * jax.random.normal(ks[6], (cout,), jnp.float32),
        b2=0.1 * jax.random.normal(ks[7], (cout,), jnp.float32),
        rm2=0.1 * jax.random.normal(ks[8], (cout,), jnp.float32),
        rv2=jax.random.uniform(ks[9], (cout,), jnp.float32, 0.5, 1.5),
    )


# --------------------------------------------------------------------------
# Host-side operand construction (done once in make_extractor)
# --------------------------------------------------------------------------
def _adaptive_bins(n_in, n_out):
    """PyTorch AdaptiveAvgPool bin-averaging matrix (n_out, n_in)."""
    P = np.zeros((n_out, n_in), np.float32)
    for i in range(n_out):
        s = (i * n_in) // n_out
        e = -((-(i + 1) * n_in) // n_out)     # ceil
        P[i, s:e] = 1.0 / (e - s)
    return P


def _conv_toeplitz(w_oihw, w_in):
    """Per-kh matrices M[kh] (w_in*cin, w_out*cout): a VALID (KH,KW) conv over
       the flattened [w, c] lane axis is  y[h] = sum_kh x2d[h+kh] @ M[kh]."""
    w = np.asarray(w_oihw)
    cout, cin, kh_, kw_ = w.shape
    w_out = w_in - kw_ + 1
    M = np.zeros((kh_, w_in * cin, w_out * cout), np.float32)
    for kh in range(kh_):
        for kw in range(kw_):
            blk = w[:, :, kh, kw].T                       # (cin, cout)
            for wo in range(w_out):
                M[kh, (wo + kw) * cin:(wo + kw + 1) * cin,
                  wo * cout:(wo + 1) * cout] = blk
    return M


def build_operands(params, cin, cout, H, W):
    W1 = W - KW + 1
    W1p = W1 // 2
    W2 = W1p - KW + 1
    H1 = H - KH + 1
    H2 = H1 - KH + 1
    assert W2 >= 1 and H2 >= 1, "input spatial size too small for the network"

    M1 = _conv_toeplitz(params['w1'], W)        # (2, W*cin,   W1*32)
    M2 = _conv_toeplitz(params['w2'], W1p)      # (2, W1p*32,  W2*cout)

    def fold_bn(g, b, rm, rv):
        g, b, rm, rv = (np.asarray(a) for a in (g, b, rm, rv))
        s = g / np.sqrt(rv + BN_EPS)
        return s.astype(np.float32), (b - rm * s).astype(np.float32)

    s1, bb1 = fold_bn(params['g1'], params['b1'], params['rm1'], params['rv1'])
    s2, bb2 = fold_bn(params['g2'], params['b2'], params['rm2'], params['rv2'])

    # AvgPool2d((1,2)) as a (W1*32, W1p*32) matrix (floor mode drops odd col)
    pool = np.zeros((W1 * C_MID, W1p * C_MID), np.float32)
    half_eye = 0.5 * np.eye(C_MID, dtype=np.float32)
    for wp in range(W1p):
        for j in range(2):
            r = (2 * wp + j) * C_MID
            pool[r:r + C_MID, wp * C_MID:(wp + 1) * C_MID] = half_eye

    # conv1: fold BN scale into the columns; stack kh=0/1 along K -> (2*W*cin, W1*32)
    m1 = np.concatenate([M1[0], M1[1]], axis=0) * np.tile(s1, W1)[None, :]
    # conv2: fuse AvgPool + BN scale; kh=0/1 halves side by side -> (W1*32, 2*W2*cout)
    m2a = (pool @ M2[0]) * np.tile(s2, W2)[None, :]
    m2b = (pool @ M2[1]) * np.tile(s2, W2)[None, :]
    m2 = np.concatenate([m2a, m2b], axis=1)

    b1t = np.tile(bb1, W1)[None, :]
    b2t = np.tile(bb2, W2)[None, :]

    # Adaptive pools: skip when they are identities (H2==82 / W2==2).
    use_ph = (H2 != ADAPT_H)
    use_pw = (W2 != ADAPT_W)
    ph = _adaptive_bins(H2, ADAPT_H) if use_ph else None          # (82, H2)
    pw = None
    if use_pw:
        bins = _adaptive_bins(W2, ADAPT_W)                        # (2, W2)
        pw = np.zeros((W2 * cout, ADAPT_W * cout), np.float32)
        for wo in range(ADAPT_W):
            for w_ in range(W2):
                if bins[wo, w_] != 0.0:
                    pw[w_ * cout:(w_ + 1) * cout,
                       wo * cout:(wo + 1) * cout] = (
                        bins[wo, w_] * np.eye(cout, dtype=np.float32))

    jb = lambda a: jnp.asarray(a, jnp.bfloat16)   # MXU operands (f32 accum)
    jf = lambda a: jnp.asarray(a, jnp.float32)    # elementwise stays f32
    ops = dict(m1=jb(m1), m2=jb(m2), b1=jf(b1t), b2=jf(b2t),
               ph=(jb(ph) if use_ph else None),
               pw=(jb(pw) if use_pw else None))
    meta = dict(H1=H1, H2=H2, W2=W2, use_ph=use_ph, use_pw=use_pw)
    return ops, meta


# --------------------------------------------------------------------------
# block_b heuristic
# --------------------------------------------------------------------------
def _pick_block_b(N, cap=16):
    try:
        kind = jax.devices()[0].device_kind.lower()
    except Exception:
        kind = ""
    two_core = "v7" in kind          # v7x: 2 TensorCores -> keep >= 2 grid steps
    divisors = [b for b in range(1, min(N, cap) + 1) if N % b == 0]
    best = divisors[-1]
    if two_core:
        multi = [b for b in divisors if N // b >= 2]
        if multi:
            best = multi[-1]
    return best


# --------------------------------------------------------------------------
# Wrapper: build operands once, return a jitted forward closure
# --------------------------------------------------------------------------
def make_extractor(params, cin, cout, H, W):
    ops, meta = build_operands(params, cin, cout, H, W)
    H1, H2, W2 = meta['H1'], meta['H2'], meta['W2']
    use_ph, use_pw = meta['use_ph'], meta['use_pw']
    H1p = _round_up(H1, 8)           # pad per-sample rows -> aligned slices / blocks
    K1 = 2 * W * cin                 # augmented conv1 contraction dim
    NW = W2 * cout
    OC = ADAPT_W * cout

    def full_spec(a):
        nd = a.ndim
        return pl.BlockSpec(a.shape, lambda n, _nd=nd: (0,) * _nd)

    def forward(x_nchw, block_b=None):
        N = x_nchw.shape[0]
        B = _pick_block_b(N) if block_b is None else block_b
        assert N % B == 0, "block_b must divide the batch size"

        # bf16 before the transpose (halves its HBM traffic); NCHW -> [h, w*c];
        # augment the lane axis with the next row so conv1 is one K=2*W*Cin dot.
        x = x_nchw.astype(jnp.bfloat16)
        x2d = jnp.transpose(x, (0, 2, 3, 1)).reshape(N, H, W * cin)
        x_aug = jnp.concatenate([x2d[:, :H1, :], x2d[:, 1:H1 + 1, :]], axis=-1)
        if H1p != H1:
            x_aug = jnp.pad(x_aug, ((0, 0), (0, H1p - H1), (0, 0)))
        x_flat = x_aug.reshape(N * H1p, K1)

        operands = [x_flat, ops['m1'], ops['b1'], ops['m2'], ops['b2']]
        in_specs = [pl.BlockSpec((B * H1p, K1), lambda n: (n, 0))]
        in_specs += [full_spec(a) for a in operands[1:]]
        if use_ph:
            operands.append(ops['ph']); in_specs.append(full_spec(ops['ph']))
        if use_pw:
            operands.append(ops['pw']); in_specs.append(full_spec(ops['pw']))

        out_cols = B * OC
        kernel = make_extractor_kernel(B, H1p, H2, NW, OC, use_ph, use_pw)
        out2d = pl.pallas_call(
            kernel,
            grid=(N // B,),
            in_specs=in_specs,
            out_specs=pl.BlockSpec((None, ADAPT_H, out_cols),
                                   lambda n: (n, 0, 0)),
            out_shape=jax.ShapeDtypeStruct((N // B, ADAPT_H, out_cols),
                                           jnp.float32),
            compiler_params=pltpu.CompilerParams(
                dimension_semantics=("parallel",),
                vmem_limit_bytes=32 * 1024 * 1024),
        )(*operands)

        # (N//B, 82, B*2*cout) -> NCHW (N, cout, 82, 2)
        out = out2d.reshape(N // B, ADAPT_H, B, ADAPT_W, cout)
        out = jnp.transpose(out, (0, 2, 4, 1, 3)).reshape(
            N, cout, ADAPT_H, ADAPT_W)
        return out

    return jax.jit(forward, static_argnames=('block_b',))


# --------------------------------------------------------------------------
# Pure-JAX reference (mirrors the PyTorch forward semantics)
# --------------------------------------------------------------------------
def reference_forward(x, params, cout):
    dn = ('NCHW', 'OIHW', 'NCHW')

    def bn(y, g, b, rm, rv):
        s = g / jnp.sqrt(rv + BN_EPS)
        return y * s[None, :, None, None] + (b - rm * s)[None, :, None, None]

    y = lax.conv_general_dilated(x, params['w1'], (1, 1), 'VALID',
                                 dimension_numbers=dn,
                                 precision=lax.Precision.HIGHEST)
    y = jnp.maximum(bn(y, params['g1'], params['b1'],
                       params['rm1'], params['rv1']), 0.0)
    Wp = y.shape[-1] // 2
    y = 0.5 * (y[..., 0:2 * Wp:2] + y[..., 1:2 * Wp:2])       # AvgPool2d((1,2))
    y = lax.conv_general_dilated(y, params['w2'], (1, 1), 'VALID',
                                 dimension_numbers=dn,
                                 precision=lax.Precision.HIGHEST)
    y = jnp.maximum(bn(y, params['g2'], params['b2'],
                       params['rm2'], params['rv2']), 0.0)
    Ph = jnp.asarray(_adaptive_bins(y.shape[2], ADAPT_H))
    Pw = jnp.asarray(_adaptive_bins(y.shape[3], ADAPT_W))
    y = jnp.einsum('ah,nchw->ncaw', Ph, y)
    y = jnp.einsum('bw,ncaw->ncab', Pw, y)
    return y


if __name__ == "__main__":
    key = jax.random.PRNGKey(0)
    kx, kp = jax.random.split(key)

    # small shapes consistent with the module (H=84 so conv stack yields 82 rows)
    N, CIN, COUT, H, W = 2, 4, 8, 84, 32
    x = jax.random.normal(kx, (N, CIN, H, W), jnp.float32)
    params = init_params(kp, CIN, COUT)

    extractor = make_extractor(params, CIN, COUT, H, W)
    out = extractor(x)
    out = jax.block_until_ready(out)
    assert out.shape == (N, COUT, ADAPT_H, ADAPT_W), out.shape

    ref = reference_forward(x, params, COUT)
    np.testing.assert_allclose(np.asarray(out), np.asarray(ref),
                               rtol=5e-2, atol=5e-2)
    print("KERNEL_OK")
</pallas_src>

<mosaic_0001>
module attributes {stable_mosaic.version = 11 : i64} {
  func.func @kernel(%arg0: i32, %arg1: memref<176x256xbf16, #tpu.memory_space<vmem>>, %arg2: memref<256x736xbf16, #tpu.memory_space<vmem>>, %arg3: memref<1x736xf32, #tpu.memory_space<vmem>>, %arg4: memref<736x32xbf16, #tpu.memory_space<vmem>>, %arg5: memref<1x16xf32, #tpu.memory_space<vmem>>, %arg6: memref<1x82x32xf32, #tpu.memory_space<vmem>>) attributes {dimension_semantics = [#tpu.dimension_semantics<parallel>], iteration_bounds = array<i64: 1>, scalar_prefetch = 0 : i64, scratch_operands = 0 : i64, tpu.core_type = #tpu.core_type<tc>, window_params = [{transform_indices = @transform_0, window_bounds = array<i64: 176, 256>}, {pipeline_mode = #tpu.pipeline_mode<synchronous>, transform_indices = @transform_1, window_bounds = array<i64: 256, 736>}, {pipeline_mode = #tpu.pipeline_mode<synchronous>, transform_indices = @transform_2, window_bounds = array<i64: 1, 736>}, {pipeline_mode = #tpu.pipeline_mode<synchronous>, transform_indices = @transform_3, window_bounds = array<i64: 736, 32>}, {pipeline_mode = #tpu.pipeline_mode<synchronous>, transform_indices = @transform_4, window_bounds = array<i64: 1, 16>}, {transform_indices = @transform_5, window_bounds = array<i64: 1, 82, 32>}]} {
    %c0 = arith.constant 0 : index
    %c0_0 = arith.constant 0 : index
    %0 = vector.load %arg1[%c0, %c0_0] : memref<176x256xbf16, #tpu.memory_space<vmem>>, vector<176x256xbf16>
    %c0_1 = arith.constant 0 : index
    %c0_2 = arith.constant 0 : index
    %1 = vector.load %arg2[%c0_1, %c0_2] : memref<256x736xbf16, #tpu.memory_space<vmem>>, vector<256x736xbf16>
    %cst = arith.constant dense<0.000000e+00> : vector<176x736xf32>
    %2 = tpu.matmul %0, %1, %cst {dimension_numbers = #tpu.dot_dimension_numbers<[1], [0], [0], [1], [0, 0, 1, 1], [], []>} : vector<176x256xbf16>, vector<256x736xbf16>, vector<176x736xf32> -> vector<176x736xf32>
    %c0_3 = arith.constant 0 : index
    %c0_4 = arith.constant 0 : index
    %3 = vector.load %arg3[%c0_3, %c0_4] : memref<1x736xf32, #tpu.memory_space<vmem>>, vector<1x736xf32>
    %4 = vector.broadcast %3 : vector<1x736xf32> to vector<176x736xf32>
    %5 = arith.addf %2, %4 : vector<176x736xf32>
    %cst_5 = arith.constant 0.000000e+00 : f32
    %6 = vector.broadcast %cst_5 : f32 to vector<176x736xf32>
    %7 = arith.maximumf %5, %6 : vector<176x736xf32>
    %8 = arith.truncf %7 : vector<176x736xf32> to vector<176x736xbf16>
    %c0_6 = arith.constant 0 : index
    %c0_7 = arith.constant 0 : index
    %9 = vector.load %arg4[%c0_6, %c0_7] : memref<736x32xbf16, #tpu.memory_space<vmem>>, vector<736x32xbf16>
    %cst_8 = arith.constant dense<0.000000e+00> : vector<176x32xf32>
    %10 = tpu.matmul %8, %9, %cst_8 {dimension_numbers = #tpu.dot_dimension_numbers<[1], [0], [0], [1], [0, 0, 1, 1], [], []>} : vector<176x736xbf16>, vector<736x32xbf16>, vector<176x32xf32> -> vector<176x32xf32>
    %11 = vector.extract_strided_slice %10 {offsets = [0, 0], sizes = [175, 16], strides = [1, 1]} : vector<176x32xf32> to vector<175x16xf32>
    %12 = vector.extract_strided_slice %10 {offsets = [1, 16], sizes = [175, 16], strides = [1, 1]} : vector<176x32xf32> to vector<175x16xf32>
    %13 = arith.addf %11, %12 : vector<175x16xf32>
    %c0_9 = arith.constant 0 : index
    %c0_10 = arith.constant 0 : index
    %14 = vector.load %arg5[%c0_9, %c0_10] : memref<1x16xf32, #tpu.memory_space<vmem>>, vector<1x16xf32>
    %15 = vector.broadcast %14 : vector<1x16xf32> to vector<175x16xf32>
    %16 = arith.addf %13, %15 : vector<175x16xf32>
    %cst_11 = arith.constant 0.000000e+00 : f32
    %17 = vector.broadcast %cst_11 : f32 to vector<175x16xf32>
    %18 = arith.maximumf %16, %17 : vector<175x16xf32>
    %19 = vector.extract_strided_slice %18 {offsets = [0, 0], sizes = [82, 16], strides = [1, 1]} : vector<175x16xf32> to vector<82x16xf32>
    %c0_12 = arith.constant 0 : index
    %c0_13 = arith.constant 0 : index
    %c0_14 = arith.constant 0 : index
    %20 = vector.load %arg6[%c0_12, %c0_13, %c0_14] : memref<1x82x32xf32, #tpu.memory_space<vmem>>, vector<1x82x16xf32>
    %21 = vector.shape_cast %20 : vector<1x82x16xf32> to vector<82x16xf32>
    %22 = vector.shape_cast %19 : vector<82x16xf32> to vector<1x82x16xf32>
    tpu.vector_store %arg6[%c0_12, %c0_13, %c0_14], %22 {strides = array<i32>} : memref<1x82x32xf32, #tpu.memory_space<vmem>>, vector<1x82x16xf32>,
    %23 = vector.extract_strided_slice %18 {offsets = [88, 0], sizes = [82, 16], strides = [1, 1]} : vector<175x16xf32> to vector<82x16xf32>
    %c0_15 = arith.constant 0 : index
    %c0_16 = arith.constant 0 : index
    %c16 = arith.constant 16 : index
    %24 = vector.load %arg6[%c0_15, %c0_16, %c16] : memref<1x82x32xf32, #tpu.memory_space<vmem>>, vector<1x82x16xf32>
    %25 = vector.shape_cast %24 : vector<1x82x16xf32> to vector<82x16xf32>
    %26 = vector.shape_cast %23 : vector<82x16xf32> to vector<1x82x16xf32>
    tpu.vector_store %arg6[%c0_15, %c0_16, %c16], %26 {strides = array<i32>} : memref<1x82x32xf32, #tpu.memory_space<vmem>>, vector<1x82x16xf32>,
    return
  }
  func.func @transform_0(%arg0: i32) -> (i32, i32) {
    %c0_i32 = arith.constant 0 : i32
    %c0_i32_0 = arith.constant 0 : i32
    return %arg0, %c0_i32 : i32, i32
  }
  func.func @transform_1(%arg0: i32) -> (i32, i32) {
    %c0_i32 = arith.constant 0 : i32
    %c0_i32_0 = arith.constant 0 : i32
    %c0_i32_1 = arith.constant 0 : i32
    return %c0_i32, %c0_i32_0 : i32, i32
  }
  func.func @transform_2(%arg0: i32) -> (i32, i32) {
    %c0_i32 = arith.constant 0 : i32
    %c0_i32_0 = arith.constant 0 : i32
    %c0_i32_1 = arith.constant 0 : i32
    return %c0_i32, %c0_i32_0 : i32, i32
  }
  func.func @transform_3(%arg0: i32) -> (i32, i32) {
    %c0_i32 = arith.constant 0 : i32
    %c0_i32_0 = arith.constant 0 : i32
    %c0_i32_1 = arith.constant 0 : i32
    return %c0_i32, %c0_i32_0 : i32, i32
  }
  func.func @transform_4(%arg0: i32) -> (i32, i32) {
    %c0_i32 = arith.constant 0 : i32
    %c0_i32_0 = arith.constant 0 : i32
    %c0_i32_1 = arith.constant 0 : i32
    return %c0_i32, %c0_i32_0 : i32, i32
  }
  func.func @transform_5(%arg0: i32) -> (i32, i32, i32) {
    %c0_i32 = arith.constant 0 : i32
    %c0_i32_0 = arith.constant 0 : i32
    %c0_i32_1 = arith.constant 0 : i32
    return %arg0, %c0_i32, %c0_i32_0 : i32, i32, i32
  }
}

</mosaic_0001>

<llo_original>
// kernel: forward.1
$region0: #{forward.1}
  #allocation0 [shape = 'u32[]', space=smem, size = 0x4, offset = 0x4, fixed_abs, tag = 'smem constant byte address 0x4 - core index']
  #allocation1 [shape = 'u32[144,128]{1,0:T(1,128)}', space=vmem, size = 0x12000, scoped, tag = 'internal scratch']
  %s0 = inlined_call_operand.vmem [shape: bf16[176,256], index: 0, kind: input, shape index: {}]
  %s1 = inlined_call_operand.vmem [shape: bf16[256,736], index: 1, kind: input, shape index: {}]
  %s2 = inlined_call_operand.vmem [shape: f32[1,736], index: 2, kind: input, shape index: {}]
  %s3 = inlined_call_operand.vmem [shape: bf16[736,32], index: 3, kind: input, shape index: {}]
  %s4 = inlined_call_operand.vmem [shape: f32[1,16], index: 4, kind: input, shape index: {}]
  %s5 = inlined_call_operand.vmem [shape: f32[1,82,32], index: 5, kind: output, shape index: {}]
  %s6 = sld [smem:[#allocation0]]
  $region30: #{forward.1} parent=0
    _
  %s8 = ssub.s32 1, %s6
  %s9 = scalar_select 0, %s8, %s6
  // Predicated region
  $region2: #{forward.1} parent=0 // pred_check
    _
  $region3: #{forward.1} parent=0 // pred_check_branch
    %11 = sbr.rel (0) target = $region5
  $region4: #{forward.1} parent=0 // pred_region
    _
  $region5: #{forward.1} parent=0 // pred_fallthru
    _
  // Predicated region
  $region6: #{forward.1} parent=0 // pred_check
    _
  $region7: #{forward.1} parent=0 // pred_check_branch
    %13 = sbr.rel (0) target = $region9
  $region8: #{forward.1} parent=0 // pred_region
    _
  $region9: #{forward.1} parent=0 // pred_fallthru
    _
  // Predicated region
  $region10: #{forward.1} parent=0 // pred_check
    _
  $region11: #{forward.1} parent=0 // pred_check_branch
    %15 = sbr.rel (0) target = $region13
  $region12: #{forward.1} parent=0 // pred_region
    _
  $region13: #{forward.1} parent=0 // pred_fallthru
    _
  // Predicated region
  $region14: #{forward.1} parent=0 // pred_check
    _
  $region15: #{forward.1} parent=0 // pred_check_branch
    %17 = sbr.rel (0) target = $region17
  $region16: #{forward.1} parent=0 // pred_region
    _
  $region17: #{forward.1} parent=0 // pred_fallthru
    _
  // Predicated region
  $region18: #{forward.1} parent=0 // pred_check
    _
  $region19: #{forward.1} parent=0 // pred_check_branch
    %19 = sbr.rel (0) target = $region21
  $region20: #{forward.1} parent=0 // pred_region
    _
  $region21: #{forward.1} parent=0 // pred_fallthru
    _
  %v21 = vld [vmem:[%s0] sm:$0xff]
  %v22 = vld [vmem:[%s0 + $0x8] sm:$0xff]
  %v23 = vld [vmem:[%s0 + $0x10] sm:$0xff]
  %v24 = vld [vmem:[%s0 + $0x18] sm:$0xff]
  %v25 = vld [vmem:[%s0 + $0x20] sm:$0xff]
  %v26 = vld [vmem:[%s0 + $0x28] sm:$0xff]
  %v27 = vld [vmem:[%s0 + $0x30] sm:$0xff]
  %v28 = vld [vmem:[%s0 + $0x38] sm:$0xff]
  %v29 = vld [vmem:[%s0 + $0x40] sm:$0xff]
  %v30 = vld [vmem:[%s0 + $0x48] sm:$0xff]
  %v31 = vld [vmem:[%s0 + $0x50] sm:$0xff]
  %v32 = vld [vmem:[%s0 + $0x58] sm:$0xff]
  %v33 = vld [vmem:[%s0 + $0x60] sm:$0xff]
  %v34 = vld [vmem:[%s0 + $0x68] sm:$0xff]
  %v35 = vld [vmem:[%s0 + $0x70] sm:$0xff]
  %v36 = vld [vmem:[%s0 + $0x78] sm:$0xff]
  %v37 = vld [vmem:[%s0 + $0x80] sm:$0xff]
  %v38 = vld [vmem:[%s0 + $0x88] sm:$0xff]
  %v39 = vld [vmem:[%s0 + $0x90] sm:$0xff]
  %v40 = vld [vmem:[%s0 + $0x98] sm:$0xff]
  %v41 = vld [vmem:[%s0 + $0xa0] sm:$0xff]
  %v42 = vld [vmem:[%s0 + $0xa8] sm:$0xff]
  %v43 = vld [vmem:[%s1] sm:$0xff]
  %v44 = vld [vmem:[%s1 + $0x8] sm:$0xff]
  %v45 = vld [vmem:[%s1 + $0x10] sm:$0xff]
  %v46 = vld [vmem:[%s1 + $0x18] sm:$0xff]
  %v47 = vld [vmem:[%s1 + $0x20] sm:$0xff]
  %v48 = vld [vmem:[%s1 + $0x28] sm:$0xff]
  %v49 = vld [vmem:[%s1 + $0x30] sm:$0xff]
  %v50 = vld [vmem:[%s1 + $0x38] sm:$0xff]
  %v51 = vld [vmem:[%s1 + $0x40] sm:$0xff]
  %v52 = vld [vmem:[%s1 + $0x48] sm:$0xff]
  %v53 = vld [vmem:[%s1 + $0x50] sm:$0xff]
  %v54 = vld [vmem:[%s1 + $0x58] sm:$0xff]
  %v55 = vld [vmem:[%s1 + $0x60] sm:$0xff]
  %v56 = vld [vmem:[%s1 + $0x68] sm:$0xff]
  %v57 = vld [vmem:[%s1 + $0x70] sm:$0xff]
  %v58 = vld [vmem:[%s1 + $0x78] sm:$0xff]
  %v59 = vld [vmem:[%s1 + $0x80] sm:$0xff]
  %v60 = vld [vmem:[%s1 + $0x88] sm:$0xff]
  %v61 = vld [vmem:[%s1 + $0x90] sm:$0xff]
  %v62 = vld [vmem:[%s1 + $0x98] sm:$0xff]
  %v63 = vld [vmem:[%s1 + $0xa0] sm:$0xff]
  %v64 = vld [vmem:[%s1 + $0xa8] sm:$0xff]
  %v65 = vld [vmem:[%s1 + $0xb0] sm:$0xff]
  %v66 = vld [vmem:[%s1 + $0xb8] sm:$0xff]
  %v67 = vld [vmem:[%s1 + $0xc0] sm:$0xff]
  %v68 = vld [vmem:[%s1 + $0xc8] sm:$0xff]
  %v69 = vld [vmem:[%s1 + $0xd0] sm:$0xff]
  %v70 = vld [vmem:[%s1 + $0xd8] sm:$0xff]
  %v71 = vld [vmem:[%s1 + $0xe0] sm:$0xff]
  %v72 = vld [vmem:[%s1 + $0xe8] sm:$0xff]
  %v73 = vld [vmem:[%s1 + $0xf0] sm:$0xff]
  %v74 = vld [vmem:[%s1 + $0xf8] sm:$0xff]
  %v75 = vld [vmem:[%s1 + $0x100] sm:$0xff]
  %v76 = vld [vmem:[%s1 + $0x108] sm:$0xff]
  %v77 = vld [vmem:[%s1 + $0x110] sm:$0xff]
  %v78 = vld [vmem:[%s1 + $0x118] sm:$0xff]
  %v79 = vld [vmem:[%s1 + $0x120] sm:$0xff]
  %v80 = vld [vmem:[%s1 + $0x128] sm:$0xff]
  %v81 = vld [vmem:[%s1 + $0x130] sm:$0xff]
  %v82 = vld [vmem:[%s1 + $0x138] sm:$0xff]
  %v83 = vld [vmem:[%s1 + $0x140] sm:$0xff]
  %v84 = vld [vmem:[%s1 + $0x148] sm:$0xff]
  %v85 = vld [vmem:[%s1 + $0x150] sm:$0xff]
  %v86 = vld [vmem:[%s1 + $0x158] sm:$0xff]
  %v87 = vld [vmem:[%s1 + $0x160] sm:$0xff]
  %v88 = vld [vmem:[%s1 + $0x168] sm:$0xff]
  %v89 = vld [vmem:[%s1 + $0x170] sm:$0xff]
  %v90 = vld [vmem:[%s1 + $0x178] sm:$0xff]
  %v91 = vld [vmem:[%s1 + $0x180] sm:$0xff]
  %v92 = vld [vmem:[%s1 + $0x188] sm:$0xff]
  %v93 = vld [vmem:[%s1 + $0x190] sm:$0xff]
  %v94 = vld [vmem:[%s1 + $0x198] sm:$0xff]
  %v95 = vld [vmem:[%s1 + $0x1a0] sm:$0xff]
  %v96 = vld [vmem:[%s1 + $0x1a8] sm:$0xff]
  %v97 = vld [vmem:[%s1 + $0x1b0] sm:$0xff]
  %v98 = vld [vmem:[%s1 + $0x1b8] sm:$0xff]
  %v99 = vld [vmem:[%s1 + $0x1c0] sm:$0xff]
  %v100 = vld [vmem:[%s1 + $0x1c8] sm:$0xff]
  %v101 = vld [vmem:[%s1 + $0x1d0] sm:$0xff]
  %v102 = vld [vmem:[%s1 + $0x1d8] sm:$0xff]
  %v103 = vld [vmem:[%s1 + $0x1e0] sm:$0xff]
  %v104 = vld [vmem:[%s1 + $0x1e8] sm:$0xff]
  %v105 = vld [vmem:[%s1 + $0x1f0] sm:$0xff]
  %v106 = vld [vmem:[%s1 + $0x1f8] sm:$0xff]
  %v107 = vld [vmem:[%s1 + $0x200] sm:$0xff]
  %v108 = vld [vmem:[%s1 + $0x208] sm:$0xff]
  %v109 = vld [vmem:[%s1 + $0x210] sm:$0xff]
  %v110 = vld [vmem:[%s1 + $0x218] sm:$0xff]
  %v111 = vld [vmem:[%s1 + $0x220] sm:$0xff]
  %v112 = vld [vmem:[%s1 + $0x228] sm:$0xff]
  %v113 = vld [vmem:[%s1 + $0x230] sm:$0xff]
  %v114 = vld [vmem:[%s1 + $0x238] sm:$0xff]
  %v115 = vld [vmem:[%s1 + $0x240] sm:$0xff]
  %v116 = vld [vmem:[%s1 + $0x248] sm:$0xff]
  %v117 = vld [vmem:[%s1 + $0x250] sm:$0xff]
  %v118 = vld [vmem:[%s1 + $0x258] sm:$0xff]
  %v119 = vld [vmem:[%s1 + $0x260] sm:$0xff]
  %v120 = vld [vmem:[%s1 + $0x268] sm:$0xff]
  %v121 = vld [vmem:[%s1 + $0x270] sm:$0xff]
  %v122 = vld [vmem:[%s1 + $0x278] sm:$0xff]
  %v123 = vld [vmem:[%s1 + $0x280] sm:$0xff]
  %v124 = vld [vmem:[%s1 + $0x288] sm:$0xff]
  %v125 = vld [vmem:[%s1 + $0x290] sm:$0xff]
  %v126 = vld [vmem:[%s1 + $0x298] sm:$0xff]
  %v127 = vld [vmem:[%s1 + $0x2a0] sm:$0xff]
  %v128 = vld [vmem:[%s1 + $0x2a8] sm:$0xff]
  %v129 = vld [vmem:[%s1 + $0x2b0] sm:$0xff]
  %v130 = vld [vmem:[%s1 + $0x2b8] sm:$0xff]
  %v131 = vld [vmem:[%s1 + $0x2c0] sm:$0xff]
  %v132 = vld [vmem:[%s1 + $0x2c8] sm:$0xff]
  %v133 = vld [vmem:[%s1 + $0x2d0] sm:$0xff]
  %v134 = vld [vmem:[%s1 + $0x2d8] sm:$0xff]
  %v135 = vld [vmem:[%s1 + $0x2e0] sm:$0xff]
  %v136 = vld [vmem:[%s1 + $0x2e8] sm:$0xff]
  %v137 = vld [vmem:[%s1 + $0x2f0] sm:$0xff]
  %v138 = vld [vmem:[%s1 + $0x2f8] sm:$0xff]
  %v139 = vld [vmem:[%s2] sm:$0x3f]
  %v141 = vlaneseq
  %v142 = vshrl.u32 %v141, 7
  %v143 = vsub.s32 0, %v142
  %v144 = vrot.slane %v139, %v143
  %v145 = vlaneseq
  %v146 = vshrl.u32 %v145, 7
  %v147 = vsub.s32 1, %v146
  %v148 = vrot.slane %v139, %v147
  %v149 = vlaneseq
  %v150 = vshrl.u32 %v149, 7
  %v151 = vsub.s32 2, %v150
  %v152 = vrot.slane %v139, %v151
  %v153 = vlaneseq
  %v154 = vshrl.u32 %v153, 7
  %v155 = vsub.s32 3, %v154
  %v156 = vrot.slane %v139, %v155
  %v157 = vlaneseq
  %v158 = vshrl.u32 %v157, 7
  %v159 = vsub.s32 4, %v158
  %v160 = vrot.slane %v139, %v159
  %v161 = vlaneseq
  %v162 = vshrl.u32 %v161, 7
  %v163 = vsub.s32 5, %v162
  %v164 = vrot.slane %v139, %v163
  %v193 = vunpack.c.l.b16 %v21
  %v194 = vunpack.c.h.b16 %v21
  %v195 = vunpack.c.l.b16 %v22
  %v196 = vunpack.c.h.b16 %v22
  %v197 = vunpack.c.l.b16 %v23
  %v198 = vunpack.c.h.b16 %v23
  %v199 = vunpack.c.l.b16 %v24
  %v200 = vunpack.c.h.b16 %v24
  %v201 = vunpack.c.l.b16 %v25
  %v202 = vunpack.c.h.b16 %v25
  %v203 = vunpack.c.l.b16 %v26
  %v204 = vunpack.c.h.b16 %v26
  %v205 = vunpack.c.l.b16 %v27
  %v206 = vunpack.c.h.b16 %v27
  %v207 = vunpack.c.l.b16 %v28
  %v208 = vunpack.c.h.b16 %v28
  %v209 = vunpack.c.l.b16 %v29
  %v210 = vunpack.c.h.b16 %v29
  %v211 = vunpack.c.l.b16 %v30
  %v212 = vunpack.c.h.b16 %v30
  %v213 = vunpack.c.l.b16 %v31
  %v214 = vunpack.c.h.b16 %v31
  %v215 = vunpack.c.l.b16 %v32
  %v216 = vunpack.c.h.b16 %v32
  %v217 = vunpack.c.l.b16 %v33
  %v218 = vunpack.c.h.b16 %v33
  %v219 = vunpack.c.l.b16 %v34
  %v220 = vunpack.c.h.b16 %v34
  %v221 = vunpack.c.l.b16 %v35
  %v222 = vunpack.c.h.b16 %v35
  %v223 = vunpack.c.l.b16 %v36
  %v224 = vunpack.c.h.b16 %v36
  %v225 = vunpack.c.l.b16 %v37
  %v226 = vunpack.c.h.b16 %v37
  %v227 = vunpack.c.l.b16 %v38
  %v228 = vunpack.c.h.b16 %v38
  %v229 = vunpack.c.l.b16 %v39
  %v230 = vunpack.c.h.b16 %v39
  %v231 = vunpack.c.l.b16 %v40
  %v232 = vunpack.c.h.b16 %v40
  %v233 = vunpack.c.l.b16 %v41
  %v234 = vunpack.c.h.b16 %v41
  %v235 = vunpack.c.l.b16 %v42
  %v236 = vunpack.c.h.b16 %v42
  %v237 = vpack.c.b16 %v195, %v193
  %v238 = vpack.c.b16 %v196, %v194
  %v239 = vpack.c.b16 %v199, %v197
  %v240 = vpack.c.b16 %v200, %v198
  %v241 = vpack.c.b16 %v203, %v201
  %v242 = vpack.c.b16 %v204, %v202
  %v243 = vpack.c.b16 %v207, %v205
  %v244 = vpack.c.b16 %v208, %v206
  %v245 = vpack.c.b16 %v211, %v209
  %v246 = vpack.c.b16 %v212, %v210
  %v247 = vpack.c.b16 %v215, %v213
  %v248 = vpack.c.b16 %v216, %v214
  %v249 = vpack.c.b16 %v219, %v217
  %v250 = vpack.c.b16 %v220, %v218
  %v251 = vpack.c.b16 %v223, %v221
  %v252 = vpack.c.b16 %v224, %v222
  %v253 = vpack.c.b16 %v227, %v225
  %v254 = vpack.c.b16 %v228, %v226
  %v255 = vpack.c.b16 %v231, %v229
  %v256 = vpack.c.b16 %v232, %v230
  %v257 = vpack.c.b16 %v235, %v233
  %v258 = vpack.c.b16 %v236, %v234
  %v377 = vunpack.c.l.b16 %v43
  %v378 = vunpack.c.h.b16 %v43
  %v379 = vunpack.c.l.b16 %v44
  %v380 = vunpack.c.h.b16 %v44
  %v381 = vunpack.c.l.b16 %v45
  %v382 = vunpack.c.h.b16 %v45
  %v383 = vunpack.c.l.b16 %v46
  %v384 = vunpack.c.h.b16 %v46
  %v385 = vunpack.c.l.b16 %v47
  %v386 = vunpack.c.h.b16 %v47
  %v387 = vunpack.c.l.b16 %v48
  %v388 = vunpack.c.h.b16 %v48
  %v389 = vunpack.c.l.b16 %v49
  %v390 = vunpack.c.h.b16 %v49
  %v391 = vunpack.c.l.b16 %v50
  %v392 = vunpack.c.h.b16 %v50
  %v393 = vunpack.c.l.b16 %v51
  %v394 = vunpack.c.h.b16 %v51
  %v395 = vunpack.c.l.b16 %v52
  %v396 = vunpack.c.h.b16 %v52
  %v397 = vunpack.c.l.b16 %v53
  %v398 = vunpack.c.h.b16 %v53
  %v399 = vunpack.c.l.b16 %v54
  %v400 = vunpack.c.h.b16 %v54
  %v401 = vunpack.c.l.b16 %v55
  %v402 = vunpack.c.h.b16 %v55
  %v403 = vunpack.c.l.b16 %v56
  %v404 = vunpack.c.h.b16 %v56
  %v405 = vunpack.c.l.b16 %v57
  %v406 = vunpack.c.h.b16 %v57
  %v407 = vunpack.c.l.b16 %v58
  %v408 = vunpack.c.h.b16 %v58
  %v409 = vunpack.c.l.b16 %v59
  %v410 = vunpack.c.h.b16 %v59
  %v411 = vunpack.c.l.b16 %v60
  %v412 = vunpack.c.h.b16 %v60
  %v413 = vunpack.c.l.b16 %v61
  %v414 = vunpack.c.h.b16 %v61
  %v415 = vunpack.c.l.b16 %v62
  %v416 = vunpack.c.h.b16 %v62
  %v417 = vunpack.c.l.b16 %v63
  %v418 = vunpack.c.h.b16 %v63
  %v419 = vunpack.c.l.b16 %v64
  %v420 = vunpack.c.h.b16 %v64
  %v421 = vunpack.c.l.b16 %v65
  %v422 = vunpack.c.h.b16 %v65
  %v423 = vunpack.c.l.b16 %v66
  %v424 = vunpack.c.h.b16 %v66
  %v425 = vunpack.c.l.b16 %v67
  %v426 = vunpack.c.h.b16 %v67
  %v427 = vunpack.c.l.b16 %v68
  %v428 = vunpack.c.h.b16 %v68
  %v429 = vunpack.c.l.b16 %v69
  %v430 = vunpack.c.h.b16 %v69
  %v431 = vunpack.c.l.b16 %v70
  %v432 = vunpack.c.h.b16 %v70
  %v433 = vunpack.c.l.b16 %v71
  %v434 = vunpack.c.h.b16 %v71
  %v435 = vunpack.c.l.b16 %v72
  %v436 = vunpack.c.h.b16 %v72
  %v437 = vunpack.c.l.b16 %v73
  %v438 = vunpack.c.h.b16 %v73
  %v439 = vunpack.c.l.b16 %v74
  %v440 = vunpack.c.h.b16 %v74
  %v441 = vunpack.c.l.b16 %v75
  %v442 = vunpack.c.h.b16 %v75
  %v443 = vunpack.c.l.b16 %v76
  %v444 = vunpack.c.h.b16 %v76
  %v445 = vunpack.c.l.b16 %v77
  %v446 = vunpack.c.h.b16 %v77
  %v447 = vunpack.c.l.b16 %v78
  %v448 = vunpack.c.h.b16 %v78
  %v449 = vunpack.c.l.b16 %v79
  %v450 = vunpack.c.h.b16 %v79
  %v451 = vunpack.c.l.b16 %v80
  %v452 = vunpack.c.h.b16 %v80
  %v453 = vunpack.c.l.b16 %v81
  %v454 = vunpack.c.h.b16 %v81
  %v455 = vunpack.c.l.b16 %v82
  %v456 = vunpack.c.h.b16 %v82
  %v457 = vunpack.c.l.b16 %v83
  %v458 = vunpack.c.h.b16 %v83
  %v459 = vunpack.c.l.b16 %v84
  %v460 = vunpack.c.h.b16 %v84
  %v461 = vunpack.c.l.b16 %v85
  %v462 = vunpack.c.h.b16 %v85
  %v463 = vunpack.c.l.b16 %v86
  %v464 = vunpack.c.h.b16 %v86
  %v465 = vunpack.c.l.b16 %v87
  %v466 = vunpack.c.h.b16 %v87
  %v467 = vunpack.c.l.b16 %v88
  %v468 = vunpack.c.h.b16 %v88
  %v469 = vunpack.c.l.b16 %v89
  %v470 = vunpack.c.h.b16 %v89
  %v471 = vunpack.c.l.b16 %v90
  %v472 = vunpack.c.h.b16 %v90
  %v473 = vunpack.c.l.b16 %v91
  %v474 = vunpack.c.h.b16 %v91
  %v475 = vunpack.c.l.b16 %v92
  %v476 = vunpack.c.h.b16 %v92
  %v477 = vunpack.c.l.b16 %v93
  %v478 = vunpack.c.h.b16 %v93
  %v479 = vunpack.c.l.b16 %v94
  %v480 = vunpack.c.h.b16 %v94
  %v481 = vunpack.c.l.b16 %v95
  %v482 = vunpack.c.h.b16 %v95
  %v483 = vunpack.c.l.b16 %v96
  %v484 = vunpack.c.h.b16 %v96
  %v485 = vunpack.c.l.b16 %v97
  %v486 = vunpack.c.h.b16 %v97
  %v487 = vunpack.c.l.b16 %v98
  %v488 = vunpack.c.h.b16 %v98
  %v489 = vunpack.c.l.b16 %v99
  %v490 = vunpack.c.h.b16 %v99
  %v491 = vunpack.c.l.b16 %v100
  %v492 = vunpack.c.h.b16 %v100
  %v493 = vunpack.c.l.b16 %v101
  %v494 = vunpack.c.h.b16 %v101
  %v495 = vunpack.c.l.b16 %v102
  %v496 = vunpack.c.h.b16 %v102
  %v497 = vunpack.c.l.b16 %v103
  %v498 = vunpack.c.h.b16 %v103
  %v499 = vunpack.c.l.b16 %v104
  %v500 = vunpack.c.h.b16 %v104
  %v501 = vunpack.c.l.b16 %v105
  %v502 = vunpack.c.h.b16 %v105
  %v503 = vunpack.c.l.b16 %v106
  %v504 = vunpack.c.h.b16 %v106
  %v505 = vunpack.c.l.b16 %v107
  %v506 = vunpack.c.h.b16 %v107
  %v507 = vunpack.c.l.b16 %v108
  %v508 = vunpack.c.h.b16 %v108
  %v509 = vunpack.c.l.b16 %v109
  %v510 = vunpack.c.h.b16 %v109
  %v511 = vunpack.c.l.b16 %v110
  %v512 = vunpack.c.h.b16 %v110
  %v513 = vunpack.c.l.b16 %v111
  %v514 = vunpack.c.h.b16 %v111
  %v515 = vunpack.c.l.b16 %v112
  %v516 = vunpack.c.h.b16 %v112
  %v517 = vunpack.c.l.b16 %v113
  %v518 = vunpack.c.h.b16 %v113
  %v519 = vunpack.c.l.b16 %v114
  %v520 = vunpack.c.h.b16 %v114
  %v521 = vunpack.c.l.b16 %v115
  %v522 = vunpack.c.h.b16 %v115
  %v523 = vunpack.c.l.b16 %v116
  %v524 = vunpack.c.h.b16 %v116
  %v525 = vunpack.c.l.b16 %v117
  %v526 = vunpack.c.h.b16 %v117
  %v527 = vunpack.c.l.b16 %v118
  %v528 = vunpack.c.h.b16 %v118
  %v529 = vunpack.c.l.b16 %v119
  %v530 = vunpack.c.h.b16 %v119
  %v531 = vunpack.c.l.b16 %v120
  %v532 = vunpack.c.h.b16 %v120
  %v533 = vunpack.c.l.b16 %v121
  %v534 = vunpack.c.h.b16 %v121
  %v535 = vunpack.c.l.b16 %v122
  %v536 = vunpack.c.h.b16 %v122
  %v537 = vunpack.c.l.b16 %v123
  %v538 = vunpack.c.h.b16 %v123
  %v539 = vunpack.c.l.b16 %v124
  %v540 = vunpack.c.h.b16 %v124
  %v541 = vunpack.c.l.b16 %v125
  %v542 = vunpack.c.h.b16 %v125
  %v543 = vunpack.c.l.b16 %v126
  %v544 = vunpack.c.h.b16 %v126
  %v545 = vunpack.c.l.b16 %v127
  %v546 = vunpack.c.h.b16 %v127
  %v547 = vunpack.c.l.b16 %v128
  %v548 = vunpack.c.h.b16 %v128
  %v549 = vunpack.c.l.b16 %v129
  %v550 = vunpack.c.h.b16 %v129
  %v551 = vunpack.c.l.b16 %v130
  %v552 = vunpack.c.h.b16 %v130
  %v553 = vunpack.c.l.b16 %v131
  %v554 = vunpack.c.h.b16 %v131
  %v555 = vunpack.c.l.b16 %v132
  %v556 = vunpack.c.h.b16 %v132
  %v557 = vunpack.c.l.b16 %v133
  %v558 = vunpack.c.h.b16 %v133
  %v559 = vunpack.c.l.b16 %v134
  %v560 = vunpack.c.h.b16 %v134
  %v561 = vunpack.c.l.b16 %v135
  %v562 = vunpack.c.h.b16 %v135
  %v563 = vunpack.c.l.b16 %v136
  %v564 = vunpack.c.h.b16 %v136
  %v565 = vunpack.c.l.b16 %v137
  %v566 = vunpack.c.h.b16 %v137
  %v567 = vunpack.c.l.b16 %v138
  %v568 = vunpack.c.h.b16 %v138
  %v569 = vpack.c.b16 %v383, %v377
  %v570 = vpack.c.b16 %v384, %v378
  %v571 = vpack.c.b16 %v385, %v379
  %v572 = vpack.c.b16 %v386, %v380
  %v573 = vpack.c.b16 %v387, %v381
  %v574 = vpack.c.b16 %v388, %v382
  %v575 = vpack.c.b16 %v395, %v389
  %v576 = vpack.c.b16 %v396, %v390
  %v577 = vpack.c.b16 %v397, %v391
  %v578 = vpack.c.b16 %v398, %v392
  %v579 = vpack.c.b16 %v399, %v393
  %v580 = vpack.c.b16 %v400, %v394
  %v581 = vpack.c.b16 %v407, %v401
  %v582 = vpack.c.b16 %v408, %v402
  %v583 = vpack.c.b16 %v409, %v403
  %v584 = vpack.c.b16 %v410, %v404
  %v585 = vpack.c.b16 %v411, %v405
  %v586 = vpack.c.b16 %v412, %v406
  %v587 = vpack.c.b16 %v419, %v413
  %v588 = vpack.c.b16 %v420, %v414
  %v589 = vpack.c.b16 %v421, %v415
  %v590 = vpack.c.b16 %v422, %v416
  %v591 = vpack.c.b16 %v423, %v417
  %v592 = vpack.c.b16 %v424, %v418
  %v593 = vpack.c.b16 %v431, %v425
  %v594 = vpack.c.b16 %v432, %v426
  %v595 = vpack.c.b16 %v433, %v427
  %v596 = vpack.c.b16 %v434, %v428
  %v597 = vpack.c.b16 %v435, %v429
  %v598 = vpack.c.b16 %v436, %v430
  %v599 = vpack.c.b16 %v443, %v437
  %v600 = vpack.c.b16 %v444, %v438
  %v601 = vpack.c.b16 %v445, %v439
  %v602 = vpack.c.b16 %v446, %v440
  %v603 = vpack.c.b16 %v447, %v441
  %v604 = vpack.c.b16 %v448, %v442
  %v605 = vpack.c.b16 %v455, %v449
  %v606 = vpack.c.b16 %v456, %v450
  %v607 = vpack.c.b16 %v457, %v451
  %v608 = vpack.c.b16 %v458, %v452
  %v609 = vpack.c.b16 %v459, %v453
  %v610 = vpack.c.b16 %v460, %v454
  %v611 = vpack.c.b16 %v467, %v461
  %v612 = vpack.c.b16 %v468, %v462
  %v613 = vpack.c.b16 %v469, %v463
  %v614 = vpack.c.b16 %v470, %v464
  %v615 = vpack.c.b16 %v471, %v465
  %v616 = vpack.c.b16 %v472, %v466
  %v617 = vpack.c.b16 %v479, %v473
  %v618 = vpack.c.b16 %v480, %v474
  %v619 = vpack.c.b16 %v481, %v475
  %v620 = vpack.c.b16 %v482, %v476
  %v621 = vpack.c.b16 %v483, %v477
  %v622 = vpack.c.b16 %v484, %v478
  %v623 = vpack.c.b16 %v491, %v485
  %v624 = vpack.c.b16 %v492, %v486
  %v625 = vpack.c.b16 %v493, %v487
  %v626 = vpack.c.b16 %v494, %v488
  %v627 = vpack.c.b16 %v495, %v489
  %v628 = vpack.c.b16 %v496, %v490
  %v629 = vpack.c.b16 %v503, %v497
  %v630 = vpack.c.b16 %v504, %v498
  %v631 = vpack.c.b16 %v505, %v499
  %v632 = vpack.c.b16 %v506, %v500
  %v633 = vpack.c.b16 %v507, %v501
  %v634 = vpack.c.b16 %v508, %v502
  %v635 = vpack.c.b16 %v515, %v509
  %v636 = vpack.c.b16 %v516, %v510
  %v637 = vpack.c.b16 %v517, %v511
  %v638 = vpack.c.b16 %v518, %v512
  %v639 = vpack.c.b16 %v519, %v513
  %v640 = vpack.c.b16 %v520, %v514
  %v641 = vpack.c.b16 %v527, %v521
  %v642 = vpack.c.b16 %v528, %v522
  %v643 = vpack.c.b16 %v529, %v523
  %v644 = vpack.c.b16 %v530, %v524
  %v645 = vpack.c.b16 %v531, %v525
  %v646 = vpack.c.b16 %v532, %v526
  %v647 = vpack.c.b16 %v539, %v533
  %v648 = vpack.c.b16 %v540, %v534
  %v649 = vpack.c.b16 %v541, %v535
  %v650 = vpack.c.b16 %v542, %v536
  %v651 = vpack.c.b16 %v543, %v537
  %v652 = vpack.c.b16 %v544, %v538
  %v653 = vpack.c.b16 %v551, %v545
  %v654 = vpack.c.b16 %v552, %v546
  %v655 = vpack.c.b16 %v553, %v547
  %v656 = vpack.c.b16 %v554, %v548
  %v657 = vpack.c.b16 %v555, %v549
  %v658 = vpack.c.b16 %v556, %v550
  %v659 = vpack.c.b16 %v563, %v557
  %v660 = vpack.c.b16 %v564, %v558
  %v661 = vpack.c.b16 %v565, %v559
  %v662 = vpack.c.b16 %v566, %v560
  %v663 = vpack.c.b16 %v567, %v561
  %v664 = vpack.c.b16 %v568, %v562
  %761 = vmatprep.subr.bf16.mxu0 %v612
  %762 = vmatpush1.bf16.msra.mxu0 %v611
  %763 = vmatprep.subr.bf16.mxu0 %v606
  %764 = vmatpush1.bf16.msra.mxu0 %v605
  %765 = vmatprep.subr.bf16.mxu0 %v600
  %766 = vmatpush1.bf16.msra.mxu0 %v599
  %767 = vmatprep.subr.bf16.mxu0 %v594
  %768 = vmatpush1.bf16.msra.mxu0 %v593
  %769 = vmatprep.subr.bf16.mxu0 %v588
  %770 = vmatpush1.bf16.msra.mxu0 %v587
  %771 = vmatprep.subr.bf16.mxu0 %v582
  %772 = vmatpush1.bf16.msra.mxu0 %v581
  %773 = vmatprep.subr.bf16.mxu0 %v576
  %774 = vmatpush1.bf16.msra.mxu0 %v575
  %775 = vmatprep.subr.bf16.mxu0 %v570
  %776 = vmatpush1.bf16.msra.mxu0 %v569
  %777 = vmatprep.subr.bf16.mxu0 %v660
  %778 = vmatpush2.bf16.msra.mxu0 %v659
  %779 = vmatprep.subr.bf16.mxu0 %v654
  %780 = vmatpush2.bf16.msra.mxu0 %v653
  %781 = vmatprep.subr.bf16.mxu0 %v648
  %782 = vmatpush2.bf16.msra.mxu0 %v647
  %783 = vmatprep.subr.bf16.mxu0 %v642
  %784 = vmatpush2.bf16.msra.mxu0 %v641
  %785 = vmatprep.subr.bf16.mxu0 %v636
  %786 = vmatpush2.bf16.msra.mxu0 %v635
  %787 = vmatprep.subr.bf16.mxu0 %v630
  %788 = vmatpush2.bf16.msra.mxu0 %v629
  %789 = vmatprep.subr.bf16.mxu0 %v624
  %790 = vmatpush2.bf16.msra.mxu0 %v623
  %791 = vmatprep.subr.bf16.mxu0 %v618
  %792 = vmatpush2.bf16.msra.mxu0 %v617
  %793 = vmatprep.mubr.bf16.mxu0 %v238
  %794 = vmatmul.mubr.bf16.gmra.mxu0 %v237
  %v795 = vpop.f32.mrf.mxu0
  %v796 = vadd.f32 %v144, %v795
  %v797 = vpop.f32.mrf.mxu0
  %v798 = vadd.f32 %v148, %v797
  %v799 = vpop.f32.mrf.mxu0
  %v800 = vadd.f32 %v144, %v799
  %v801 = vpop.f32.mrf.mxu0
  %v802 = vadd.f32 %v148, %v801
  %803 = vmatprep.mubr.bf16.mxu0 %v240
  %804 = vmatmul.mubr.bf16.gmra.mxu0 %v239
  %v805 = vpop.f32.mrf.mxu0
  %v806 = vadd.f32 %v144, %v805
  %v807 = vpop.f32.mrf.mxu0
  %v808 = vadd.f32 %v148, %v807
  %v809 = vpop.f32.mrf.mxu0
  %v810 = vadd.f32 %v144, %v809
  %v811 = vpop.f32.mrf.mxu0
  %v812 = vadd.f32 %v148, %v811
  %813 = vmatprep.mubr.bf16.mxu0 %v242
  %814 = vmatmul.mubr.bf16.gmra.mxu0 %v241
  %v815 = vpop.f32.mrf.mxu0
  %v816 = vadd.f32 %v144, %v815
  %v817 = vpop.f32.mrf.mxu0
  %v818 = vadd.f32 %v148, %v817
  %v819 = vpop.f32.mrf.mxu0
  %v820 = vadd.f32 %v144, %v819
  %v821 = vpop.f32.mrf.mxu0
  %v822 = vadd.f32 %v148, %v821
  %823 = vmatprep.mubr.bf16.mxu0 %v244
  %824 = vmatmul.mubr.bf16.gmra.mxu0 %v243
  %v825 = vpop.f32.mrf.mxu0
  %v826 = vadd.f32 %v144, %v825
  %v827 = vpop.f32.mrf.mxu0
  %v828 = vadd.f32 %v148, %v827
  %v829 = vpop.f32.mrf.mxu0
  %v830 = vadd.f32 %v144, %v829
  %v831 = vpop.f32.mrf.mxu0
  %v832 = vadd.f32 %v148, %v831
  %833 = vmatprep.mubr.bf16.mxu0 %v246
  %834 = vmatmul.mubr.bf16.gmra.mxu0 %v245
  %v835 = vpop.f32.mrf.mxu0
  %v836 = vadd.f32 %v144, %v835
  %v837 = vpop.f32.mrf.mxu0
  %v838 = vadd.f32 %v148, %v837
  %v839 = vpop.f32.mrf.mxu0
  %v840 = vadd.f32 %v144, %v839
  %v841 = vpop.f32.mrf.mxu0
  %v842 = vadd.f32 %v148, %v841
  %843 = vmatprep.mubr.bf16.mxu0 %v248
  %844 = vmatmul.mubr.bf16.gmra.mxu0 %v247
  %v845 = vpop.f32.mrf.mxu0
  %v846 = vadd.f32 %v144, %v845
  %v847 = vpop.f32.mrf.mxu0
  %v848 = vadd.f32 %v148, %v847
  %v849 = vpop.f32.mrf.mxu0
  %v850 = vadd.f32 %v144, %v849
  %v851 = vpop.f32.mrf.mxu0
  %v852 = vadd.f32 %v148, %v851
  %853 = vmatprep.mubr.bf16.mxu0 %v250
  %854 = vmatmul.mubr.bf16.gmra.mxu0 %v249
  %v855 = vpop.f32.mrf.mxu0
  %v856 = vadd.f32 %v144, %v855
  %v857 = vpop.f32.mrf.mxu0
  %v858 = vadd.f32 %v148, %v857
  %v859 = vpop.f32.mrf.mxu0
  %v860 = vadd.f32 %v144, %v859
  %v861 = vpop.f32.mrf.mxu0
  %v862 = vadd.f32 %v148, %v861
  %863 = vmatprep.mubr.bf16.mxu0 %v252
  %864 = vmatmul.mubr.bf16.gmra.mxu0 %v251
  %v865 = vpop.f32.mrf.mxu0
  %v866 = vadd.f32 %v144, %v865
  %v867 = vpop.f32.mrf.mxu0
  %v868 = vadd.f32 %v148, %v867
  %v869 = vpop.f32.mrf.mxu0
  %v870 = vadd.f32 %v144, %v869
  %v871 = vpop.f32.mrf.mxu0
  %v872 = vadd.f32 %v148, %v871
  %873 = vmatprep.mubr.bf16.mxu0 %v254
  %874 = vmatmul.mubr.bf16.gmra.mxu0 %v253
  %v875 = vpop.f32.mrf.mxu0
  %v876 = vadd.f32 %v144, %v875
  %v877 = vpop.f32.mrf.mxu0
  %v878 = vadd.f32 %v148, %v877
  %v879 = vpop.f32.mrf.mxu0
  %v880 = vadd.f32 %v144, %v879
  %v881 = vpop.f32.mrf.mxu0
  %v882 = vadd.f32 %v148, %v881
  %883 = vmatprep.mubr.bf16.mxu0 %v256
  %884 = vmatmul.mubr.bf16.gmra.mxu0 %v255
  %v885 = vpop.f32.mrf.mxu0
  %v886 = vadd.f32 %v144, %v885
  %v887 = vpop.f32.mrf.mxu0
  %v888 = vadd.f32 %v148, %v887
  %v889 = vpop.f32.mrf.mxu0
  %v890 = vadd.f32 %v144, %v889
  %v891 = vpop.f32.mrf.mxu0
  %v892 = vadd.f32 %v148, %v891
  %893 = vmatprep.mubr.bf16.mxu0 %v258
  %894 = vmatmul.mubr.bf16.gmra.mxu0 %v257
  %v895 = vpop.f32.mrf.mxu0
  %v896 = vadd.f32 %v144, %v895
  %v897 = vpop.f32.mrf.mxu0
  %v898 = vadd.f32 %v148, %v897
  %v899 = vpop.f32.mrf.mxu0
  %v900 = vadd.f32 %v144, %v899
  %v901 = vpop.f32.mrf.mxu0
  %v902 = vadd.f32 %v148, %v901
  %903 = vdwg.mxu0
  %904 = vmatprep.subr.bf16.mxu0 %v614
  %905 = vmatpush1.bf16.msra.mxu0 %v613
  %906 = vmatprep.subr.bf16.mxu0 %v608
  %907 = vmatpush1.bf16.msra.mxu0 %v607
  %908 = vmatprep.subr.bf16.mxu0 %v602
  %909 = vmatpush1.bf16.msra.mxu0 %v601
  %910 = vmatprep.subr.bf16.mxu0 %v596
  %911 = vmatpush1.bf16.msra.mxu0 %v595
  %912 = vmatprep.subr.bf16.mxu0 %v590
  %913 = vmatpush1.bf16.msra.mxu0 %v589
  %914 = vmatprep.subr.bf16.mxu0 %v584
  %915 = vmatpush1.bf16.msra.mxu0 %v583
  %916 = vmatprep.subr.bf16.mxu0 %v578
  %917 = vmatpush1.bf16.msra.mxu0 %v577
  %918 = vmatprep.subr.bf16.mxu0 %v572
  %919 = vmatpush1.bf16.msra.mxu0 %v571
  %920 = vmatprep.subr.bf16.mxu0 %v662
  %921 = vmatpush2.bf16.msra.mxu0 %v661
  %922 = vmatprep.subr.bf16.mxu0 %v656
  %923 = vmatpush2.bf16.msra.mxu0 %v655
  %924 = vmatprep.subr.bf16.mxu0 %v650
  %925 = vmatpush2.bf16.msra.mxu0 %v649
  %926 = vmatprep.subr.bf16.mxu0 %v644
  %927 = vmatpush2.bf16.msra.mxu0 %v643
  %928 = vmatprep.subr.bf16.mxu0 %v638
  %929 = vmatpush2.bf16.msra.mxu0 %v637
  %930 = vmatprep.subr.bf16.mxu0 %v632
  %931 = vmatpush2.bf16.msra.mxu0 %v631
  %932 = vmatprep.subr.bf16.mxu0 %v626
  %933 = vmatpush2.bf16.msra.mxu0 %v625
  %934 = vmatprep.subr.bf16.mxu0 %v620
  %935 = vmatpush2.bf16.msra.mxu0 %v619
  %936 = vmatprep.mubr.bf16.mxu0 %v238
  %937 = vmatmul.mubr.bf16.gmra.mxu0 %v237
  %v938 = vpop.f32.mrf.mxu0
  %v939 = vadd.f32 %v152, %v938
  %v940 = vpop.f32.mrf.mxu0
  %v941 = vadd.f32 %v156, %v940
  %v942 = vpop.f32.mrf.mxu0
  %v943 = vadd.f32 %v152, %v942
  %v944 = vpop.f32.mrf.mxu0
  %v945 = vadd.f32 %v156, %v944
  %946 = vmatprep.mubr.bf16.mxu0 %v240
  %947 = vmatmul.mubr.bf16.gmra.mxu0 %v239
  %v948 = vpop.f32.mrf.mxu0
  %v949 = vadd.f32 %v152, %v948
  %v950 = vpop.f32.mrf.mxu0
  %v951 = vadd.f32 %v156, %v950
  %v952 = vpop.f32.mrf.mxu0
  %v953 = vadd.f32 %v152, %v952
  %v954 = vpop.f32.mrf.mxu0
  %v955 = vadd.f32 %v156, %v954
  %956 = vmatprep.mubr.bf16.mxu0 %v242
  %957 = vmatmul.mubr.bf16.gmra.mxu0 %v241
  %v958 = vpop.f32.mrf.mxu0
  %v959 = vadd.f32 %v152, %v958
  %v960 = vpop.f32.mrf.mxu0
  %v961 = vadd.f32 %v156, %v960
  %v962 = vpop.f32.mrf.mxu0
  %v963 = vadd.f32 %v152, %v962
  %v964 = vpop.f32.mrf.mxu0
  %v965 = vadd.f32 %v156, %v964
  %966 = vmatprep.mubr.bf16.mxu0 %v244
  %967 = vmatmul.mubr.bf16.gmra.mxu0 %v243
  %v968 = vpop.f32.mrf.mxu0
  %v969 = vadd.f32 %v152, %v968
  %v970 = vpop.f32.mrf.mxu0
  %v971 = vadd.f32 %v156, %v970
  %v972 = vpop.f32.mrf.mxu0
  %v973 = vadd.f32 %v152, %v972
  %v974 = vpop.f32.mrf.mxu0
  %v975 = vadd.f32 %v156, %v974
  %976 = vmatprep.mubr.bf16.mxu0 %v246
  %977 = vmatmul.mubr.bf16.gmra.mxu0 %v245
  %v978 = vpop.f32.mrf.mxu0
  %v979 = vadd.f32 %v152, %v978
  %v980 = vpop.f32.mrf.mxu0
  %v981 = vadd.f32 %v156, %v980
  %v982 = vpop.f32.mrf.mxu0
  %v983 = vadd.f32 %v152, %v982
  %v984 = vpop.f32.mrf.mxu0
  %v985 = vadd.f32 %v156, %v984
  %986 = vmatprep.mubr.bf16.mxu0 %v248
  %987 = vmatmul.mubr.bf16.gmra.mxu0 %v247
  %v988 = vpop.f32.mrf.mxu0
  %v989 = vadd.f32 %v152, %v988
  %v990 = vpop.f32.mrf.mxu0
  %v991 = vadd.f32 %v156, %v990
  %v992 = vpop.f32.mrf.mxu0
  %v993 = vadd.f32 %v152, %v992
  %v994 = vpop.f32.mrf.mxu0
  %v995 = vadd.f32 %v156, %v994
  %996 = vmatprep.mubr.bf16.mxu0 %v250
  %997 = vmatmul.mubr.bf16.gmra.mxu0 %v249
  %v998 = vpop.f32.mrf.mxu0
  %v999 = vadd.f32 %v152, %v998
  %v1000 = vpop.f32.mrf.mxu0
  %v1001 = vadd.f32 %v156, %v1000
  %v1002 = vpop.f32.mrf.mxu0
  %v1003 = vadd.f32 %v152, %v1002
  %v1004 = vpop.f32.mrf.mxu0
  %v1005 = vadd.f32 %v156, %v1004
  %1006 = vmatprep.mubr.bf16.mxu0 %v252
  %1007 = vmatmul.mubr.bf16.gmra.mxu0 %v251
  %v1008 = vpop.f32.mrf.mxu0
  %v1009 = vadd.f32 %v152, %v1008
  %v1010 = vpop.f32.mrf.mxu0
  %v1011 = vadd.f32 %v156, %v1010
  %v1012 = vpop.f32.mrf.mxu0
  %v1013 = vadd.f32 %v152, %v1012
  %v1014 = vpop.f32.mrf.mxu0
  %v1015 = vadd.f32 %v156, %v1014
  %1016 = vmatprep.mubr.bf16.mxu0 %v254
  %1017 = vmatmul.mubr.bf16.gmra.mxu0 %v253
  %v1018 = vpop.f32.mrf.mxu0
  %v1019 = vadd.f32 %v152, %v1018
  %v1020 = vpop.f32.mrf.mxu0
  %v1021 = vadd.f32 %v156, %v1020
  %v1022 = vpop.f32.mrf.mxu0
  %v1023 = vadd.f32 %v152, %v1022
  %v1024 = vpop.f32.mrf.mxu0
  %v1025 = vadd.f32 %v156, %v1024
  %1026 = vmatprep.mubr.bf16.mxu0 %v256
  %1027 = vmatmul.mubr.bf16.gmra.mxu0 %v255
  %v1028 = vpop.f32.mrf.mxu0
  %v1029 = vadd.f32 %v152, %v1028
  %v1030 = vpop.f32.mrf.mxu0
  %v1031 = vadd.f32 %v156, %v1030
  %v1032 = vpop.f32.mrf.mxu0
  %v1033 = vadd.f32 %v152, %v1032
  %v1034 = vpop.f32.mrf.mxu0
  %v1035 = vadd.f32 %v156, %v1034
  %1036 = vmatprep.mubr.bf16.mxu0 %v258
  %1037 = vmatmul.mubr.bf16.gmra.mxu0 %v257
  %v1038 = vpop.f32.mrf.mxu0
  %v1039 = vadd.f32 %v152, %v1038
  %v1040 = vpop.f32.mrf.mxu0
  %v1041 = vadd.f32 %v156, %v1040
  %v1042 = vpop.f32.mrf.mxu0
  %v1043 = vadd.f32 %v152, %v1042
  %v1044 = vpop.f32.mrf.mxu0
  %v1045 = vadd.f32 %v156, %v1044
  %1046 = vdwg.mxu0
  %1047 = vmatprep.subr.bf16.mxu0 %v616
  %1048 = vmatpush1.bf16.msra.mxu0 %v615
  %1049 = vmatprep.subr.bf16.mxu0 %v610
  %1050 = vmatpush1.bf16.msra.mxu0 %v609
  %1051 = vmatprep.subr.bf16.mxu0 %v604
  %1052 = vmatpush1.bf16.msra.mxu0 %v603
  %1053 = vmatprep.subr.bf16.mxu0 %v598
  %1054 = vmatpush1.bf16.msra.mxu0 %v597
  %1055 = vmatprep.subr.bf16.mxu0 %v592
  %1056 = vmatpush1.bf16.msra.mxu0 %v591
  %1057 = vmatprep.subr.bf16.mxu0 %v586
  %1058 = vmatpush1.bf16.msra.mxu0 %v585
  %1059 = vmatprep.subr.bf16.mxu0 %v580
  %1060 = vmatpush1.bf16.msra.mxu0 %v579
  %1061 = vmatprep.subr.bf16.mxu0 %v574
  %1062 = vmatpush1.bf16.msra.mxu0 %v573
  %1063 = vmatprep.subr.bf16.mxu0 %v664
  %1064 = vmatpush2.bf16.msra.mxu0 %v663
  %1065 = vmatprep.subr.bf16.mxu0 %v658
  %1066 = vmatpush2.bf16.msra.mxu0 %v657
  %1067 = vmatprep.subr.bf16.mxu0 %v652
  %1068 = vmatpush2.bf16.msra.mxu0 %v651
  %1069 = vmatprep.subr.bf16.mxu0 %v646
  %1070 = vmatpush2.bf16.msra.mxu0 %v645
  %1071 = vmatprep.subr.bf16.mxu0 %v640
  %1072 = vmatpush2.bf16.msra.mxu0 %v639
  %1073 = vmatprep.subr.bf16.mxu0 %v634
  %1074 = vmatpush2.bf16.msra.mxu0 %v633
  %1075 = vmatprep.subr.bf16.mxu0 %v628
  %1076 = vmatpush2.bf16.msra.mxu0 %v627
  %1077 = vmatprep.subr.bf16.mxu0 %v622
  %1078 = vmatpush2.bf16.msra.mxu0 %v621
  %1079 = vmatprep.mubr.bf16.mxu0 %v238
  %1080 = vmatmul.mubr.bf16.gmra.mxu0 %v237
  %v1081 = vpop.f32.mrf.mxu0
  %v1082 = vadd.f32 %v160, %v1081
  %v1083 = vpop.f32.mrf.mxu0
  %v1084 = vadd.f32 %v164, %v1083
  %v1085 = vpop.f32.mrf.mxu0
  %v1086 = vadd.f32 %v160, %v1085
  %v1087 = vpop.f32.mrf.mxu0
  %v1088 = vadd.f32 %v164, %v1087
  %1089 = vmatprep.mubr.bf16.mxu0 %v240
  %1090 = vmatmul.mubr.bf16.gmra.mxu0 %v239
  %v1091 = vpop.f32.mrf.mxu0
  %v1092 = vadd.f32 %v160, %v1091
  %v1093 = vpop.f32.mrf.mxu0
  %v1094 = vadd.f32 %v164, %v1093
  %v1095 = vpop.f32.mrf.mxu0
  %v1096 = vadd.f32 %v160, %v1095
  %v1097 = vpop.f32.mrf.mxu0
  %v1098 = vadd.f32 %v164, %v1097
  %1099 = vmatprep.mubr.bf16.mxu0 %v242
  %1100 = vmatmul.mubr.bf16.gmra.mxu0 %v241
  %v1101 = vpop.f32.mrf.mxu0
  %v1102 = vadd.f32 %v160, %v1101
  %v1103 = vpop.f32.mrf.mxu0
  %v1104 = vadd.f32 %v164, %v1103
  %v1105 = vpop.f32.mrf.mxu0
  %v1106 = vadd.f32 %v160, %v1105
  %v1107 = vpop.f32.mrf.mxu0
  %v1108 = vadd.f32 %v164, %v1107
  %1109 = vmatprep.mubr.bf16.mxu0 %v244
  %1110 = vmatmul.mubr.bf16.gmra.mxu0 %v243
  %v1111 = vpop.f32.mrf.mxu0
  %v1112 = vadd.f32 %v160, %v1111
  %v1113 = vpop.f32.mrf.mxu0
  %v1114 = vadd.f32 %v164, %v1113
  %v1115 = vpop.f32.mrf.mxu0
  %v1116 = vadd.f32 %v160, %v1115
  %v1117 = vpop.f32.mrf.mxu0
  %v1118 = vadd.f32 %v164, %v1117
  %1119 = vmatprep.mubr.bf16.mxu0 %v246
  %1120 = vmatmul.mubr.bf16.gmra.mxu0 %v245
  %v1121 = vpop.f32.mrf.mxu0
  %v1122 = vadd.f32 %v160, %v1121
  %v1123 = vpop.f32.mrf.mxu0
  %v1124 = vadd.f32 %v164, %v1123
  %v1125 = vpop.f32.mrf.mxu0
  %v1126 = vadd.f32 %v160, %v1125
  %v1127 = vpop.f32.mrf.mxu0
  %v1128 = vadd.f32 %v164, %v1127
  %1129 = vmatprep.mubr.bf16.mxu0 %v248
  %1130 = vmatmul.mubr.bf16.gmra.mxu0 %v247
  %v1131 = vpop.f32.mrf.mxu0
  %v1132 = vadd.f32 %v160, %v1131
  %v1133 = vpop.f32.mrf.mxu0
  %v1134 = vadd.f32 %v164, %v1133
  %v1135 = vpop.f32.mrf.mxu0
  %v1136 = vadd.f32 %v160, %v1135
  %v1137 = vpop.f32.mrf.mxu0
  %v1138 = vadd.f32 %v164, %v1137
  %1139 = vmatprep.mubr.bf16.mxu0 %v250
  %1140 = vmatmul.mubr.bf16.gmra.mxu0 %v249
  %v1141 = vpop.f32.mrf.mxu0
  %v1142 = vadd.f32 %v160, %v1141
  %v1143 = vpop.f32.mrf.mxu0
  %v1144 = vadd.f32 %v164, %v1143
  %v1145 = vpop.f32.mrf.mxu0
  %v1146 = vadd.f32 %v160, %v1145
  %v1147 = vpop.f32.mrf.mxu0
  %v1148 = vadd.f32 %v164, %v1147
  %1149 = vmatprep.mubr.bf16.mxu0 %v252
  %1150 = vmatmul.mubr.bf16.gmra.mxu0 %v251
  %v1151 = vpop.f32.mrf.mxu0
  %v1152 = vadd.f32 %v160, %v1151
  %v1153 = vpop.f32.mrf.mxu0
  %v1154 = vadd.f32 %v164, %v1153
  %v1155 = vpop.f32.mrf.mxu0
  %v1156 = vadd.f32 %v160, %v1155
  %v1157 = vpop.f32.mrf.mxu0
  %v1158 = vadd.f32 %v164, %v1157
  %1159 = vmatprep.mubr.bf16.mxu0 %v254
  %1160 = vmatmul.mubr.bf16.gmra.mxu0 %v253
  %v1161 = vpop.f32.mrf.mxu0
  %v1162 = vadd.f32 %v160, %v1161
  %v1163 = vpop.f32.mrf.mxu0
  %v1164 = vadd.f32 %v164, %v1163
  %v1165 = vpop.f32.mrf.mxu0
  %v1166 = vadd.f32 %v160, %v1165
  %v1167 = vpop.f32.mrf.mxu0
  %v1168 = vadd.f32 %v164, %v1167
  %1169 = vmatprep.mubr.bf16.mxu0 %v256
  %1170 = vmatmul.mubr.bf16.gmra.mxu0 %v255
  %v1171 = vpop.f32.mrf.mxu0
  %v1172 = vadd.f32 %v160, %v1171
  %v1173 = vpop.f32.mrf.mxu0
  %v1174 = vadd.f32 %v164, %v1173
  %v1175 = vpop.f32.mrf.mxu0
  %v1176 = vadd.f32 %v160, %v1175
  %v1177 = vpop.f32.mrf.mxu0
  %v1178 = vadd.f32 %v164, %v1177
  %1179 = vmatprep.mubr.bf16.mxu0 %v258
  %1180 = vmatmul.mubr.bf16.gmra.mxu0 %v257
  %v1181 = vpop.f32.mrf.mxu0
  %v1182 = vadd.f32 %v160, %v1181
  %v1183 = vpop.f32.mrf.mxu0
  %v1184 = vadd.f32 %v164, %v1183
  %v1185 = vpop.f32.mrf.mxu0
  %v1186 = vadd.f32 %v160, %v1185
  %v1187 = vpop.f32.mrf.mxu0
  %v1188 = vadd.f32 %v164, %v1187
  %1189 = vdwg.mxu0
  %v1190 = vmax.f32 %v796, 0.0
  %v1191 = vmax.f32 %v798, 0.0
  %v1192 = vmax.f32 %v939, 0.0
  %v1193 = vmax.f32 %v941, 0.0
  %v1194 = vmax.f32 %v1082, 0.0
  %v1195 = vmax.f32 %v1084, 0.0
  %v1196 = vmax.f32 %v800, 0.0
  %v1197 = vmax.f32 %v802, 0.0
  %v1198 = vmax.f32 %v943, 0.0
  %v1199 = vmax.f32 %v945, 0.0
  %v1200 = vmax.f32 %v1086, 0.0
  %v1201 = vmax.f32 %v1088, 0.0
  %v1202 = vmax.f32 %v806, 0.0
  %v1203 = vmax.f32 %v808, 0.0
  %v1204 = vmax.f32 %v949, 0.0
  %v1205 = vmax.f32 %v951, 0.0
  %v1206 = vmax.f32 %v1092, 0.0
  %v1207 = vmax.f32 %v1094, 0.0
  %v1208 = vmax.f32 %v810, 0.0
  %v1209 = vmax.f32 %v812, 0.0
  %v1210 = vmax.f32 %v953, 0.0
  %v1211 = vmax.f32 %v955, 0.0
  %v1212 = vmax.f32 %v1096, 0.0
  %v1213 = vmax.f32 %v1098, 0.0
  %v1214 = vmax.f32 %v816, 0.0
  %v1215 = vmax.f32 %v818, 0.0
  %v1216 = vmax.f32 %v959, 0.0
  %v1217 = vmax.f32 %v961, 0.0
  %v1218 = vmax.f32 %v1102, 0.0
  %v1219 = vmax.f32 %v1104, 0.0
  %v1220 = vmax.f32 %v820, 0.0
  %v1221 = vmax.f32 %v822, 0.0
  %v1222 = vmax.f32 %v963, 0.0
  %v1223 = vmax.f32 %v965, 0.0
  %v1224 = vmax.f32 %v1106, 0.0
  %v1225 = vmax.f32 %v1108, 0.0
  %v1226 = vmax.f32 %v826, 0.0
  %v1227 = vmax.f32 %v828, 0.0
  %v1228 = vmax.f32 %v969, 0.0
  %v1229 = vmax.f32 %v971, 0.0
  %v1230 = vmax.f32 %v1112, 0.0
  %v1231 = vmax.f32 %v1114, 0.0
  %v1232 = vmax.f32 %v830, 0.0
  %v1233 = vmax.f32 %v832, 0.0
  %v1234 = vmax.f32 %v973, 0.0
  %v1235 = vmax.f32 %v975, 0.0
  %v1236 = vmax.f32 %v1116, 0.0
  %v1237 = vmax.f32 %v1118, 0.0
  %v1238 = vmax.f32 %v836, 0.0
  %v1239 = vmax.f32 %v838, 0.0
  %v1240 = vmax.f32 %v979, 0.0
  %v1241 = vmax.f32 %v981, 0.0
  %v1242 = vmax.f32 %v1122, 0.0
  %v1243 = vmax.f32 %v1124, 0.0
  %v1244 = vmax.f32 %v840, 0.0
  %v1245 = vmax.f32 %v842, 0.0
  %v1246 = vmax.f32 %v983, 0.0
  %v1247 = vmax.f32 %v985, 0.0
  %v1248 = vmax.f32 %v1126, 0.0
  %v1249 = vmax.f32 %v1128, 0.0
  %v1250 = vmax.f32 %v846, 0.0
  %v1251 = vmax.f32 %v848, 0.0
  %v1252 = vmax.f32 %v989, 0.0
  %v1253 = vmax.f32 %v991, 0.0
  %v1254 = vmax.f32 %v1132, 0.0
  %v1255 = vmax.f32 %v1134, 0.0
  %v1256 = vmax.f32 %v850, 0.0
  %v1257 = vmax.f32 %v852, 0.0
  %v1258 = vmax.f32 %v993, 0.0
  %v1259 = vmax.f32 %v995, 0.0
  %v1260 = vmax.f32 %v1136, 0.0
  %v1261 = vmax.f32 %v1138, 0.0
  %v1262 = vmax.f32 %v856, 0.0
  %v1263 = vmax.f32 %v858, 0.0
  %v1264 = vmax.f32 %v999, 0.0
  %v1265 = vmax.f32 %v1001, 0.0
  %v1266 = vmax.f32 %v1142, 0.0
  %v1267 = vmax.f32 %v1144, 0.0
  %v1268 = vmax.f32 %v860, 0.0
  %v1269 = vmax.f32 %v862, 0.0
  %v1270 = vmax.f32 %v1003, 0.0
  %v1271 = vmax.f32 %v1005, 0.0
  %v1272 = vmax.f32 %v1146, 0.0
  %v1273 = vmax.f32 %v1148, 0.0
  %v1274 = vmax.f32 %v866, 0.0
  %v1275 = vmax.f32 %v868, 0.0
  %v1276 = vmax.f32 %v1009, 0.0
  %v1277 = vmax.f32 %v1011, 0.0
  %v1278 = vmax.f32 %v1152, 0.0
  %v1279 = vmax.f32 %v1154, 0.0
  %v1280 = vmax.f32 %v870, 0.0
  %v1281 = vmax.f32 %v872, 0.0
  %v1282 = vmax.f32 %v1013, 0.0
  %v1283 = vmax.f32 %v1015, 0.0
  %v1284 = vmax.f32 %v1156, 0.0
  %v1285 = vmax.f32 %v1158, 0.0
  %v1286 = vmax.f32 %v876, 0.0
  %v1287 = vmax.f32 %v878, 0.0
  %v1288 = vmax.f32 %v1019, 0.0
  %v1289 = vmax.f32 %v1021, 0.0
  %v1290 = vmax.f32 %v1162, 0.0
  %v1291 = vmax.f32 %v1164, 0.0
  %v1292 = vmax.f32 %v880, 0.0
  %v1293 = vmax.f32 %v882, 0.0
  %v1294 = vmax.f32 %v1023, 0.0
  %v1295 = vmax.f32 %v1025, 0.0
  %v1296 = vmax.f32 %v1166, 0.0
  %v1297 = vmax.f32 %v1168, 0.0
  %v1298 = vmax.f32 %v886, 0.0
  %v1299 = vmax.f32 %v888, 0.0
  %v1300 = vmax.f32 %v1029, 0.0
  %v1301 = vmax.f32 %v1031, 0.0
  %v1302 = vmax.f32 %v1172, 0.0
  %v1303 = vmax.f32 %v1174, 0.0
  %v1304 = vmax.f32 %v890, 0.0
  %v1305 = vmax.f32 %v892, 0.0
  %v1306 = vmax.f32 %v1033, 0.0
  %v1307 = vmax.f32 %v1035, 0.0
  %v1308 = vmax.f32 %v1176, 0.0
  %v1309 = vmax.f32 %v1178, 0.0
  %v1310 = vmax.f32 %v896, 0.0
  %v1311 = vmax.f32 %v898, 0.0
  %v1312 = vmax.f32 %v1039, 0.0
  %v1313 = vmax.f32 %v1041, 0.0
  %v1314 = vmax.f32 %v1182, 0.0
  %v1315 = vmax.f32 %v1184, 0.0
  %v1316 = vmax.f32 %v900, 0.0
  %v1317 = vmax.f32 %v902, 0.0
  %v1318 = vmax.f32 %v1043, 0.0
  %v1319 = vmax.f32 %v1045, 0.0
  %v1320 = vmax.f32 %v1186, 0.0
  %v1321 = vmax.f32 %v1188, 0.0
  %v1322 = vpack.c.bf16 %v1196, %v1190
  %v1323 = vpack.c.bf16 %v1197, %v1191
  %v1324 = vpack.c.bf16 %v1198, %v1192
  %v1325 = vpack.c.bf16 %v1199, %v1193
  %v1326 = vpack.c.bf16 %v1200, %v1194
  %v1327 = vpack.c.bf16 %v1201, %v1195
  %v1328 = vpack.c.bf16 %v1208, %v1202
  %v1329 = vpack.c.bf16 %v1209, %v1203
  %v1330 = vpack.c.bf16 %v1210, %v1204
  %v1331 = vpack.c.bf16 %v1211, %v1205
  %v1332 = vpack.c.bf16 %v1212, %v1206
  %v1333 = vpack.c.bf16 %v1213, %v1207
  %v1334 = vpack.c.bf16 %v1220, %v1214
  %v1335 = vpack.c.bf16 %v1221, %v1215
  %v1336 = vpack.c.bf16 %v1222, %v1216
  %v1337 = vpack.c.bf16 %v1223, %v1217
  %v1338 = vpack.c.bf16 %v1224, %v1218
  %v1339 = vpack.c.bf16 %v1225, %v1219
  %v1340 = vpack.c.bf16 %v1232, %v1226
  %v1341 = vpack.c.bf16 %v1233, %v1227
  %v1342 = vpack.c.bf16 %v1234, %v1228
  %v1343 = vpack.c.bf16 %v1235, %v1229
  %v1344 = vpack.c.bf16 %v1236, %v1230
  %v1345 = vpack.c.bf16 %v1237, %v1231
  %v1346 = vpack.c.bf16 %v1244, %v1238
  %v1347 = vpack.c.bf16 %v1245, %v1239
  %v1348 = vpack.c.bf16 %v1246, %v1240
  %v1349 = vpack.c.bf16 %v1247, %v1241
  %v1350 = vpack.c.bf16 %v1248, %v1242
  %v1351 = vpack.c.bf16 %v1249, %v1243
  %v1352 = vpack.c.bf16 %v1256, %v1250
  %v1353 = vpack.c.bf16 %v1257, %v1251
  %v1354 = vpack.c.bf16 %v1258, %v1252
  %v1355 = vpack.c.bf16 %v1259, %v1253
  %v1356 = vpack.c.bf16 %v1260, %v1254
  %v1357 = vpack.c.bf16 %v1261, %v1255
  %v1358 = vpack.c.bf16 %v1268, %v1262
  %v1359 = vpack.c.bf16 %v1269, %v1263
  %v1360 = vpack.c.bf16 %v1270, %v1264
  %v1361 = vpack.c.bf16 %v1271, %v1265
  %v1362 = vpack.c.bf16 %v1272, %v1266
  %v1363 = vpack.c.bf16 %v1273, %v1267
  %v1364 = vpack.c.bf16 %v1280, %v1274
  %v1365 = vpack.c.bf16 %v1281, %v1275
  %v1366 = vpack.c.bf16 %v1282, %v1276
  %v1367 = vpack.c.bf16 %v1283, %v1277
  %v1368 = vpack.c.bf16 %v1284, %v1278
  %v1369 = vpack.c.bf16 %v1285, %v1279
  %v1370 = vpack.c.bf16 %v1292, %v1286
  %v1371 = vpack.c.bf16 %v1293, %v1287
  %v1372 = vpack.c.bf16 %v1294, %v1288
  %v1373 = vpack.c.bf16 %v1295, %v1289
  %v1374 = vpack.c.bf16 %v1296, %v1290
  %v1375 = vpack.c.bf16 %v1297, %v1291
  %v1376 = vpack.c.bf16 %v1304, %v1298
  %v1377 = vpack.c.bf16 %v1305, %v1299
  %v1378 = vpack.c.bf16 %v1306, %v1300
  %v1379 = vpack.c.bf16 %v1307, %v1301
  %v1380 = vpack.c.bf16 %v1308, %v1302
  %v1381 = vpack.c.bf16 %v1309, %v1303
  %v1382 = vpack.c.bf16 %v1316, %v1310
  %v1383 = vpack.c.bf16 %v1317, %v1311
  %v1384 = vpack.c.bf16 %v1318, %v1312
  %v1385 = vpack.c.bf16 %v1319, %v1313
  %v1386 = vpack.c.bf16 %v1320, %v1314
  %v1387 = vpack.c.bf16 %v1321, %v1315
  %v1388 = vld [vmem:[%s3] sm:$0xf]
  %v1389 = vld [vmem:[%s3 + $0x4] sm:$0xf]
  %v1390 = vld [vmem:[%s3 + $0x8] sm:$0xf]
  %v1391 = vld [vmem:[%s3 + $0xc] sm:$0xf]
  %v1392 = vld [vmem:[%s3 + $0x10] sm:$0xf]
  %v1393 = vld [vmem:[%s3 + $0x14] sm:$0xf]
  %v1394 = vld [vmem:[%s3 + $0x18] sm:$0xf]
  %v1395 = vld [vmem:[%s3 + $0x1c] sm:$0xf]
  %v1396 = vld [vmem:[%s3 + $0x20] sm:$0xf]
  %v1397 = vld [vmem:[%s3 + $0x24] sm:$0xf]
  %v1398 = vld [vmem:[%s3 + $0x28] sm:$0xf]
  %v1399 = vld [vmem:[%s3 + $0x2c] sm:$0xf]
  %v1400 = vld [vmem:[%s3 + $0x30] sm:$0xf]
  %v1401 = vld [vmem:[%s3 + $0x34] sm:$0xf]
  %v1402 = vld [vmem:[%s3 + $0x38] sm:$0xf]
  %v1403 = vld [vmem:[%s3 + $0x3c] sm:$0xf]
  %v1404 = vld [vmem:[%s3 + $0x40] sm:$0xf]
  %v1405 = vld [vmem:[%s3 + $0x44] sm:$0xf]
  %v1406 = vld [vmem:[%s3 + $0x48] sm:$0xf]
  %v1407 = vld [vmem:[%s3 + $0x4c] sm:$0xf]
  %v1408 = vld [vmem:[%s3 + $0x50] sm:$0xf]
  %v1409 = vld [vmem:[%s3 + $0x54] sm:$0xf]
  %v1410 = vld [vmem:[%s3 + $0x58] sm:$0xf]
  %v1411 = vld [vmem:[%s3 + $0x5c] sm:$0xf]
  %v1412 = vld [vmem:[%s3 + $0x60] sm:$0xf]
  %v1413 = vld [vmem:[%s3 + $0x64] sm:$0xf]
  %v1414 = vld [vmem:[%s3 + $0x68] sm:$0xf]
  %v1415 = vld [vmem:[%s3 + $0x6c] sm:$0xf]
  %v1416 = vld [vmem:[%s3 + $0x70] sm:$0xf]
  %v1417 = vld [vmem:[%s3 + $0x74] sm:$0xf]
  %v1418 = vld [vmem:[%s3 + $0x78] sm:$0xf]
  %v1419 = vld [vmem:[%s3 + $0x7c] sm:$0xf]
  %v1420 = vld [vmem:[%s3 + $0x80] sm:$0xf]
  %v1421 = vld [vmem:[%s3 + $0x84] sm:$0xf]
  %v1422 = vld [vmem:[%s3 + $0x88] sm:$0xf]
  %v1423 = vld [vmem:[%s3 + $0x8c] sm:$0xf]
  %v1424 = vld [vmem:[%s3 + $0x90] sm:$0xf]
  %v1425 = vld [vmem:[%s3 + $0x94] sm:$0xf]
  %v1426 = vld [vmem:[%s3 + $0x98] sm:$0xf]
  %v1427 = vld [vmem:[%s3 + $0x9c] sm:$0xf]
  %v1428 = vld [vmem:[%s3 + $0xa0] sm:$0xf]
  %v1429 = vld [vmem:[%s3 + $0xa4] sm:$0xf]
  %v1430 = vld [vmem:[%s3 + $0xa8] sm:$0xf]
  %v1431 = vld [vmem:[%s3 + $0xac] sm:$0xf]
  %v1432 = vld [vmem:[%s3 + $0xb0] sm:$0xf]
  %v1433 = vld [vmem:[%s3 + $0xb4] sm:$0xf]
  %v1434 = vld [vmem:[%s3 + $0xb8] sm:$0xf]
  %v1435 = vld [vmem:[%s3 + $0xbc] sm:$0xf]
  %v1436 = vld [vmem:[%s3 + $0xc0] sm:$0xf]
  %v1437 = vld [vmem:[%s3 + $0xc4] sm:$0xf]
  %v1438 = vld [vmem:[%s3 + $0xc8] sm:$0xf]
  %v1439 = vld [vmem:[%s3 + $0xcc] sm:$0xf]
  %v1440 = vld [vmem:[%s3 + $0xd0] sm:$0xf]
  %v1441 = vld [vmem:[%s3 + $0xd4] sm:$0xf]
  %v1442 = vld [vmem:[%s3 + $0xd8] sm:$0xf]
  %v1443 = vld [vmem:[%s3 + $0xdc] sm:$0xf]
  %v1444 = vld [vmem:[%s3 + $0xe0] sm:$0xf]
  %v1445 = vld [vmem:[%s3 + $0xe4] sm:$0xf]
  %v1446 = vld [vmem:[%s3 + $0xe8] sm:$0xf]
  %v1447 = vld [vmem:[%s3 + $0xec] sm:$0xf]
  %v1448 = vld [vmem:[%s3 + $0xf0] sm:$0xf]
  %v1449 = vld [vmem:[%s3 + $0xf4] sm:$0xf]
  %v1450 = vld [vmem:[%s3 + $0xf8] sm:$0xf]
  %v1451 = vld [vmem:[%s3 + $0xfc] sm:$0xf]
  %v1452 = vld [vmem:[%s3 + $0x100] sm:$0xf]
  %v1453 = vld [vmem:[%s3 + $0x104] sm:$0xf]
  %v1454 = vld [vmem:[%s3 + $0x108] sm:$0xf]
  %v1455 = vld [vmem:[%s3 + $0x10c] sm:$0xf]
  %v1456 = vld [vmem:[%s3 + $0x110] sm:$0xf]
  %v1457 = vld [vmem:[%s3 + $0x114] sm:$0xf]
  %v1458 = vld [vmem:[%s3 + $0x118] sm:$0xf]
  %v1459 = vld [vmem:[%s3 + $0x11c] sm:$0xf]
  %v1460 = vld [vmem:[%s3 + $0x120] sm:$0xf]
  %v1461 = vld [vmem:[%s3 + $0x124] sm:$0xf]
  %v1462 = vld [vmem:[%s3 + $0x128] sm:$0xf]
  %v1463 = vld [vmem:[%s3 + $0x12c] sm:$0xf]
  %v1464 = vld [vmem:[%s3 + $0x130] sm:$0xf]
  %v1465 = vld [vmem:[%s3 + $0x134] sm:$0xf]
  %v1466 = vld [vmem:[%s3 + $0x138] sm:$0xf]
  %v1467 = vld [vmem:[%s3 + $0x13c] sm:$0xf]
  %v1468 = vld [vmem:[%s3 + $0x140] sm:$0xf]
  %v1469 = vld [vmem:[%s3 + $0x144] sm:$0xf]
  %v1470 = vld [vmem:[%s3 + $0x148] sm:$0xf]
  %v1471 = vld [vmem:[%s3 + $0x14c] sm:$0xf]
  %v1472 = vld [vmem:[%s3 + $0x150] sm:$0xf]
  %v1473 = vld [vmem:[%s3 + $0x154] sm:$0xf]
  %v1474 = vld [vmem:[%s3 + $0x158] sm:$0xf]
  %v1475 = vld [vmem:[%s3 + $0x15c] sm:$0xf]
  %v1476 = vld [vmem:[%s3 + $0x160] sm:$0xf]
  %v1477 = vld [vmem:[%s3 + $0x164] sm:$0xf]
  %v1478 = vld [vmem:[%s3 + $0x168] sm:$0xf]
  %v1479 = vld [vmem:[%s3 + $0x16c] sm:$0xf]
  %v1572 = vunpack.c.l.b16 %v1388
  %v1573 = vunpack.c.l.b16 %v1389
  %v1574 = vunpack.c.l.b16 %v1390
  %v1575 = vunpack.c.l.b16 %v1391
  %v1576 = vunpack.c.l.b16 %v1392
  %v1577 = vunpack.c.l.b16 %v1393
  %v1578 = vunpack.c.l.b16 %v1394
  %v1579 = vunpack.c.l.b16 %v1395
  %v1580 = vunpack.c.l.b16 %v1396
  %v1581 = vunpack.c.l.b16 %v1397
  %v1582 = vunpack.c.l.b16 %v1398
  %v1583 = vunpack.c.l.b16 %v1399
  %v1584 = vunpack.c.l.b16 %v1400
  %v1585 = vunpack.c.l.b16 %v1401
  %v1586 = vunpack.c.l.b16 %v1402
  %v1587 = vunpack.c.l.b16 %v1403
  %v1588 = vunpack.c.l.b16 %v1404
  %v1589 = vunpack.c.l.b16 %v1405
  %v1590 = vunpack.c.l.b16 %v1406
  %v1591 = vunpack.c.l.b16 %v1407
  %v1592 = vunpack.c.l.b16 %v1408
  %v1593 = vunpack.c.l.b16 %v1409
  %v1594 = vunpack.c.l.b16 %v1410
  %v1595 = vunpack.c.l.b16 %v1411
  %v1596 = vunpack.c.l.b16 %v1412
  %v1597 = vunpack.c.l.b16 %v1413
  %v1598 = vunpack.c.l.b16 %v1414
  %v1599 = vunpack.c.l.b16 %v1415
  %v1600 = vunpack.c.l.b16 %v1416
  %v1601 = vunpack.c.l.b16 %v1417
  %v1602 = vunpack.c.l.b16 %v1418
  %v1603 = vunpack.c.l.b16 %v1419
  %v1604 = vunpack.c.l.b16 %v1420
  %v1605 = vunpack.c.l.b16 %v1421
  %v1606 = vunpack.c.l.b16 %v1422
  %v1607 = vunpack.c.l.b16 %v1423
  %v1608 = vunpack.c.l.b16 %v1424
  %v1609 = vunpack.c.l.b16 %v1425
  %v1610 = vunpack.c.l.b16 %v1426
  %v1611 = vunpack.c.l.b16 %v1427
  %v1612 = vunpack.c.l.b16 %v1428
  %v1613 = vunpack.c.l.b16 %v1429
  %v1614 = vunpack.c.l.b16 %v1430
  %v1615 = vunpack.c.l.b16 %v1431
  %v1616 = vunpack.c.l.b16 %v1432
  %v1617 = vunpack.c.l.b16 %v1433
  %v1618 = vunpack.c.l.b16 %v1434
  %v1619 = vunpack.c.l.b16 %v1435
  %v1620 = vunpack.c.l.b16 %v1436
  %v1621 = vunpack.c.l.b16 %v1437
  %v1622 = vunpack.c.l.b16 %v1438
  %v1623 = vunpack.c.l.b16 %v1439
  %v1624 = vunpack.c.l.b16 %v1440
  %v1625 = vunpack.c.l.b16 %v1441
  %v1626 = vunpack.c.l.b16 %v1442
  %v1627 = vunpack.c.l.b16 %v1443
  %v1628 = vunpack.c.l.b16 %v1444
  %v1629 = vunpack.c.l.b16 %v1445
  %v1630 = vunpack.c.l.b16 %v1446
  %v1631 = vunpack.c.l.b16 %v1447
  %v1632 = vunpack.c.l.b16 %v1448
  %v1633 = vunpack.c.l.b16 %v1449
  %v1634 = vunpack.c.l.b16 %v1450
  %v1635 = vunpack.c.l.b16 %v1451
  %v1636 = vunpack.c.l.b16 %v1452
  %v1637 = vunpack.c.l.b16 %v1453
  %v1638 = vunpack.c.l.b16 %v1454
  %v1639 = vunpack.c.l.b16 %v1455
  %v1640 = vunpack.c.l.b16 %v1456
  %v1641 = vunpack.c.l.b16 %v1457
  %v1642 = vunpack.c.l.b16 %v1458
  %v1643 = vunpack.c.l.b16 %v1459
  %v1644 = vunpack.c.l.b16 %v1460
  %v1645 = vunpack.c.l.b16 %v1461
  %v1646 = vunpack.c.l.b16 %v1462
  %v1647 = vunpack.c.l.b16 %v1463
  %v1648 = vunpack.c.l.b16 %v1464
  %v1649 = vunpack.c.l.b16 %v1465
  %v1650 = vunpack.c.l.b16 %v1466
  %v1651 = vunpack.c.l.b16 %v1467
  %v1652 = vunpack.c.l.b16 %v1468
  %v1653 = vunpack.c.l.b16 %v1469
  %v1654 = vunpack.c.l.b16 %v1470
  %v1655 = vunpack.c.l.b16 %v1471
  %v1656 = vunpack.c.l.b16 %v1472
  %v1657 = vunpack.c.l.b16 %v1473
  %v1658 = vunpack.c.l.b16 %v1474
  %v1659 = vunpack.c.l.b16 %v1475
  %v1660 = vunpack.c.l.b16 %v1476
  %v1661 = vunpack.c.l.b16 %v1477
  %v1662 = vunpack.c.l.b16 %v1478
  %v1663 = vunpack.c.l.b16 %v1479
  %v1664 = vpack.c.b16 %v1573, %v1572
  %v1665 = vpack.c.b16 %v1575, %v1574
  %v1666 = vpack.c.b16 %v1577, %v1576
  %v1667 = vpack.c.b16 %v1579, %v1578
  %v1668 = vpack.c.b16 %v1581, %v1580
  %v1669 = vpack.c.b16 %v1583, %v1582
  %v1670 = vpack.c.b16 %v1585, %v1584
  %v1671 = vpack.c.b16 %v1587, %v1586
  %v1672 = vpack.c.b16 %v1589, %v1588
  %v1673 = vpack.c.b16 %v1591, %v1590
  %v1674 = vpack.c.b16 %v1593, %v1592
  %v1675 = vpack.c.b16 %v1595, %v1594
  %v1676 = vpack.c.b16 %v1597, %v1596
  %v1677 = vpack.c.b16 %v1599, %v1598
  %v1678 = vpack.c.b16 %v1601, %v1600
  %v1679 = vpack.c.b16 %v1603, %v1602
  %v1680 = vpack.c.b16 %v1605, %v1604
  %v1681 = vpack.c.b16 %v1607, %v1606
  %v1682 = vpack.c.b16 %v1609, %v1608
  %v1683 = vpack.c.b16 %v1611, %v1610
  %v1684 = vpack.c.b16 %v1613, %v1612
  %v1685 = vpack.c.b16 %v1615, %v1614
  %v1686 = vpack.c.b16 %v1617, %v1616
  %v1687 = vpack.c.b16 %v1619, %v1618
  %v1688 = vpack.c.b16 %v1621, %v1620
  %v1689 = vpack.c.b16 %v1623, %v1622
  %v1690 = vpack.c.b16 %v1625, %v1624
  %v1691 = vpack.c.b16 %v1627, %v1626
  %v1692 = vpack.c.b16 %v1629, %v1628
  %v1693 = vpack.c.b16 %v1631, %v1630
  %v1694 = vpack.c.b16 %v1633, %v1632
  %v1695 = vpack.c.b16 %v1635, %v1634
  %v1696 = vpack.c.b16 %v1637, %v1636
  %v1697 = vpack.c.b16 %v1639, %v1638
  %v1698 = vpack.c.b16 %v1641, %v1640
  %v1699 = vpack.c.b16 %v1643, %v1642
  %v1700 = vpack.c.b16 %v1645, %v1644
  %v1701 = vpack.c.b16 %v1647, %v1646
  %v1702 = vpack.c.b16 %v1649, %v1648
  %v1703 = vpack.c.b16 %v1651, %v1650
  %v1704 = vpack.c.b16 %v1653, %v1652
  %v1705 = vpack.c.b16 %v1655, %v1654
  %v1706 = vpack.c.b16 %v1657, %v1656
  %v1707 = vpack.c.b16 %v1659, %v1658
  %v1708 = vpack.c.b16 %v1661, %v1660
  %v1709 = vpack.c.b16 %v1663, %v1662
  %vm1756 = vcmask 785408
  %v1758 = vsel %vm1756, %v1327, 0
  %v1761 = vsel %vm1756, %v1333, 0
  %v1764 = vsel %vm1756, %v1339, 0
  %v1767 = vsel %vm1756, %v1345, 0
  %v1770 = vsel %vm1756, %v1351, 0
  %v1773 = vsel %vm1756, %v1357, 0
  %v1776 = vsel %vm1756, %v1363, 0
  %v1779 = vsel %vm1756, %v1369, 0
  %v1782 = vsel %vm1756, %v1375, 0
  %v1785 = vsel %vm1756, %v1381, 0
  %v1788 = vsel %vm1756, %v1387, 0
  %1790 = vmatprep.subr.bf16.mxu0 0
  %1791 = vmatpush1.bf16.msra.mxu0 %v1671
  %1792 = vmatprep.subr.bf16.mxu0 0
  %1793 = vmatpush1.bf16.msra.mxu0 %v1670
  %1794 = vmatprep.subr.bf16.mxu0 0
  %1795 = vmatpush1.bf16.msra.mxu0 %v1669
  %1796 = vmatprep.subr.bf16.mxu0 0
  %1797 = vmatpush1.bf16.msra.mxu0 %v1668
  %1798 = vmatprep.subr.bf16.mxu0 0
  %1799 = vmatpush1.bf16.msra.mxu0 %v1667
  %1800 = vmatprep.subr.bf16.mxu0 0
  %1801 = vmatpush1.bf16.msra.mxu0 %v1666
  %1802 = vmatprep.subr.bf16.mxu0 0
  %1803 = vmatpush1.bf16.msra.mxu0 %v1665
  %1804 = vmatprep.subr.bf16.mxu0 0
  %1805 = vmatpush1.bf16.msra.mxu0 %v1664
  %1806 = vmatprep.subr.bf16.mxu0 0
  %1807 = vmatpush2.bf16.msra.mxu0 %v1679
  %1808 = vmatprep.subr.bf16.mxu0 0
  %1809 = vmatpush2.bf16.msra.mxu0 %v1678
  %1810 = vmatprep.subr.bf16.mxu0 0
  %1811 = vmatpush2.bf16.msra.mxu0 %v1677
  %1812 = vmatprep.subr.bf16.mxu0 0
  %1813 = vmatpush2.bf16.msra.mxu0 %v1676
  %1814 = vmatprep.subr.bf16.mxu0 0
  %1815 = vmatpush2.bf16.msra.mxu0 %v1675
  %1816 = vmatprep.subr.bf16.mxu0 0
  %1817 = vmatpush2.bf16.msra.mxu0 %v1674
  %1818 = vmatprep.subr.bf16.mxu0 0
  %1819 = vmatpush2.bf16.msra.mxu0 %v1673
  %1820 = vmatprep.subr.bf16.mxu0 0
  %1821 = vmatpush2.bf16.msra.mxu0 %v1672
  %1822 = vmatprep.mubr.bf16.mxu0 %v1323
  %1823 = vmatmul.mubr.bf16.gmra.mxu0 %v1322
  %v1824 = vpop.f32.mrf.mxu0
  %v1825 = vadd.f32 0.0, %v1824
  %v1826 = vpop.f32.mrf.mxu0
  %v1827 = vpop.f32.mrf.mxu0
  %v1828 = vadd.f32 0.0, %v1827
  %v1829 = vpop.f32.mrf.mxu0
  %1830 = vmatprep.mubr.bf16.mxu0 %v1329
  %1831 = vmatmul.mubr.bf16.gmra.mxu0 %v1328
  %v1832 = vpop.f32.mrf.mxu0
  %v1833 = vadd.f32 0.0, %v1832
  %v1834 = vpop.f32.mrf.mxu0
  %v1835 = vpop.f32.mrf.mxu0
  %v1836 = vadd.f32 0.0, %v1835
  %v1837 = vpop.f32.mrf.mxu0
  %1838 = vmatprep.mubr.bf16.mxu0 %v1335
  %1839 = vmatmul.mubr.bf16.gmra.mxu0 %v1334
  %v1840 = vpop.f32.mrf.mxu0
  %v1841 = vadd.f32 0.0, %v1840
  %v1842 = vpop.f32.mrf.mxu0
  %v1843 = vpop.f32.mrf.mxu0
  %v1844 = vadd.f32 0.0, %v1843
  %v1845 = vpop.f32.mrf.mxu0
  %1846 = vmatprep.mubr.bf16.mxu0 %v1341
  %1847 = vmatmul.mubr.bf16.gmra.mxu0 %v1340
  %v1848 = vpop.f32.mrf.mxu0
  %v1849 = vadd.f32 0.0, %v1848
  %v1850 = vpop.f32.mrf.mxu0
  %v1851 = vpop.f32.mrf.mxu0
  %v1852 = vadd.f32 0.0, %v1851
  %v1853 = vpop.f32.mrf.mxu0
  %1854 = vmatprep.mubr.bf16.mxu0 %v1347
  %1855 = vmatmul.mubr.bf16.gmra.mxu0 %v1346
  %v1856 = vpop.f32.mrf.mxu0
  %v1857 = vadd.f32 0.0, %v1856
  %v1858 = vpop.f32.mrf.mxu0
  %v1859 = vpop.f32.mrf.mxu0
  %v1860 = vadd.f32 0.0, %v1859
  %v1861 = vpop.f32.mrf.mxu0
  %1862 = vmatprep.mubr.bf16.mxu0 %v1353
  %1863 = vmatmul.mubr.bf16.gmra.mxu0 %v1352
  %v1864 = vpop.f32.mrf.mxu0
  %v1865 = vadd.f32 0.0, %v1864
  %v1866 = vpop.f32.mrf.mxu0
  %v1867 = vpop.f32.mrf.mxu0
  %v1868 = vadd.f32 0.0, %v1867
  %v1869 = vpop.f32.mrf.mxu0
  %1870 = vmatprep.mubr.bf16.mxu0 %v1359
  %1871 = vmatmul.mubr.bf16.gmra.mxu0 %v1358
  %v1872 = vpop.f32.mrf.mxu0
  %v1873 = vadd.f32 0.0, %v1872
  %v1874 = vpop.f32.mrf.mxu0
  %v1875 = vpop.f32.mrf.mxu0
  %v1876 = vadd.f32 0.0, %v1875
  %v1877 = vpop.f32.mrf.mxu0
  %1878 = vmatprep.mubr.bf16.mxu0 %v1365
  %1879 = vmatmul.mubr.bf16.gmra.mxu0 %v1364
  %v1880 = vpop.f32.mrf.mxu0
  %v1881 = vadd.f32 0.0, %v1880
  %v1882 = vpop.f32.mrf.mxu0
  %v1883 = vpop.f32.mrf.mxu0
  %v1884 = vadd.f32 0.0, %v1883
  %v1885 = vpop.f32.mrf.mxu0
  %1886 = vmatprep.mubr.bf16.mxu0 %v1371
  %1887 = vmatmul.mubr.bf16.gmra.mxu0 %v1370
  %v1888 = vpop.f32.mrf.mxu0
  %v1889 = vadd.f32 0.0, %v1888
  %v1890 = vpop.f32.mrf.mxu0
  %v1891 = vpop.f32.mrf.mxu0
  %v1892 = vadd.f32 0.0, %v1891
  %v1893 = vpop.f32.mrf.mxu0
  %1894 = vmatprep.mubr.bf16.mxu0 %v1377
  %1895 = vmatmul.mubr.bf16.gmra.mxu0 %v1376
  %v1896 = vpop.f32.mrf.mxu0
  %v1897 = vadd.f32 0.0, %v1896
  %v1898 = vpop.f32.mrf.mxu0
  %v1899 = vpop.f32.mrf.mxu0
  %v1900 = vadd.f32 0.0, %v1899
  %v1901 = vpop.f32.mrf.mxu0
  %1902 = vmatprep.mubr.bf16.mxu0 %v1383
  %1903 = vmatmul.mubr.bf16.gmra.mxu0 %v1382
  %v1904 = vpop.f32.mrf.mxu0
  %v1905 = vadd.f32 0.0, %v1904
  %v1906 = vpop.f32.mrf.mxu0
  %v1907 = vpop.f32.mrf.mxu0
  %v1908 = vadd.f32 0.0, %v1907
  %v1909 = vpop.f32.mrf.mxu0
  %1910 = vdwg.mxu0
  %1911 = vmatprep.subr.bf16.mxu0 0
  %1912 = vmatpush1.bf16.msra.mxu0 %v1687
  %1913 = vmatprep.subr.bf16.mxu0 0
  %1914 = vmatpush1.bf16.msra.mxu0 %v1686
  %1915 = vmatprep.subr.bf16.mxu0 0
  %1916 = vmatpush1.bf16.msra.mxu0 %v1685
  %1917 = vmatprep.subr.bf16.mxu0 0
  %1918 = vmatpush1.bf16.msra.mxu0 %v1684
  %1919 = vmatprep.subr.bf16.mxu0 0
  %1920 = vmatpush1.bf16.msra.mxu0 %v1683
  %1921 = vmatprep.subr.bf16.mxu0 0
  %1922 = vmatpush1.bf16.msra.mxu0 %v1682
  %1923 = vmatprep.subr.bf16.mxu0 0
  %1924 = vmatpush1.bf16.msra.mxu0 %v1681
  %1925 = vmatprep.subr.bf16.mxu0 0
  %1926 = vmatpush1.bf16.msra.mxu0 %v1680
  %1927 = vmatprep.subr.bf16.mxu0 0
  %1928 = vmatpush2.bf16.msra.mxu0 %v1695
  %1929 = vmatprep.subr.bf16.mxu0 0
  %1930 = vmatpush2.bf16.msra.mxu0 %v1694
  %1931 = vmatprep.subr.bf16.mxu0 0
  %1932 = vmatpush2.bf16.msra.mxu0 %v1693
  %1933 = vmatprep.subr.bf16.mxu0 0
  %1934 = vmatpush2.bf16.msra.mxu0 %v1692
  %1935 = vmatprep.subr.bf16.mxu0 0
  %1936 = vmatpush2.bf16.msra.mxu0 %v1691
  %1937 = vmatprep.subr.bf16.mxu0 0
  %1938 = vmatpush2.bf16.msra.mxu0 %v1690
  %1939 = vmatprep.subr.bf16.mxu0 0
  %1940 = vmatpush2.bf16.msra.mxu0 %v1689
  %1941 = vmatprep.subr.bf16.mxu0 0
  %1942 = vmatpush2.bf16.msra.mxu0 %v1688
  %1943 = vmatprep.mubr.bf16.mxu0 %v1325
  %1944 = vmatmul.mubr.bf16.gmra.mxu0 %v1324
  %v1945 = vpop.f32.mrf.mxu0
  %v1946 = vadd.f32 %v1825, %v1945
  %v1947 = vpop.f32.mrf.mxu0
  %v1948 = vpop.f32.mrf.mxu0
  %v1949 = vadd.f32 %v1828, %v1948
  %v1950 = vpop.f32.mrf.mxu0
  %1951 = vmatprep.mubr.bf16.mxu0 %v1331
  %1952 = vmatmul.mubr.bf16.gmra.mxu0 %v1330
  %v1953 = vpop.f32.mrf.mxu0
  %v1954 = vadd.f32 %v1833, %v1953
  %v1955 = vpop.f32.mrf.mxu0
  %v1956 = vpop.f32.mrf.mxu0
  %v1957 = vadd.f32 %v1836, %v1956
  %v1958 = vpop.f32.mrf.mxu0
  %1959 = vmatprep.mubr.bf16.mxu0 %v1337
  %1960 = vmatmul.mubr.bf16.gmra.mxu0 %v1336
  %v1961 = vpop.f32.mrf.mxu0
  %v1962 = vadd.f32 %v1841, %v1961
  %v1963 = vpop.f32.mrf.mxu0
  %v1964 = vpop.f32.mrf.mxu0
  %v1965 = vadd.f32 %v1844, %v1964
  %v1966 = vpop.f32.mrf.mxu0
  %1967 = vmatprep.mubr.bf16.mxu0 %v1343
  %1968 = vmatmul.mubr.bf16.gmra.mxu0 %v1342
  %v1969 = vpop.f32.mrf.mxu0
  %v1970 = vadd.f32 %v1849, %v1969
  %v1971 = vpop.f32.mrf.mxu0
  %v1972 = vpop.f32.mrf.mxu0
  %v1973 = vadd.f32 %v1852, %v1972
  %v1974 = vpop.f32.mrf.mxu0
  %1975 = vmatprep.mubr.bf16.mxu0 %v1349
  %1976 = vmatmul.mubr.bf16.gmra.mxu0 %v1348
  %v1977 = vpop.f32.mrf.mxu0
  %v1978 = vadd.f32 %v1857, %v1977
  %v1979 = vpop.f32.mrf.mxu0
  %v1980 = vpop.f32.mrf.mxu0
  %v1981 = vadd.f32 %v1860, %v1980
  %v1982 = vpop.f32.mrf.mxu0
  %1983 = vmatprep.mubr.bf16.mxu0 %v1355
  %1984 = vmatmul.mubr.bf16.gmra.mxu0 %v1354
  %v1985 = vpop.f32.mrf.mxu0
  %v1986 = vadd.f32 %v1865, %v1985
  %v1987 = vpop.f32.mrf.mxu0
  %v1988 = vpop.f32.mrf.mxu0
  %v1989 = vadd.f32 %v1868, %v1988
  %v1990 = vpop.f32.mrf.mxu0
  %1991 = vmatprep.mubr.bf16.mxu0 %v1361
  %1992 = vmatmul.mubr.bf16.gmra.mxu0 %v1360
  %v1993 = vpop.f32.mrf.mxu0
  %v1994 = vadd.f32 %v1873, %v1993
  %v1995 = vpop.f32.mrf.mxu0
  %v1996 = vpop.f32.mrf.mxu0
  %v1997 = vadd.f32 %v1876, %v1996
  %v1998 = vpop.f32.mrf.mxu0
  %1999 = vmatprep.mubr.bf16.mxu0 %v1367
  %2000 = vmatmul.mubr.bf16.gmra.mxu0 %v1366
  %v2001 = vpop.f32.mrf.mxu0
  %v2002 = vadd.f32 %v1881, %v2001
  %v2003 = vpop.f32.mrf.mxu0
  %v2004 = vpop.f32.mrf.mxu0
  %v2005 = vadd.f32 %v1884, %v2004
  %v2006 = vpop.f32.mrf.mxu0
  %2007 = vmatprep.mubr.bf16.mxu0 %v1373
  %2008 = vmatmul.mubr.bf16.gmra.mxu0 %v1372
  %v2009 = vpop.f32.mrf.mxu0
  %v2010 = vadd.f32 %v1889, %v2009
  %v2011 = vpop.f32.mrf.mxu0
  %v2012 = vpop.f32.mrf.mxu0
  %v2013 = vadd.f32 %v1892, %v2012
  %v2014 = vpop.f32.mrf.mxu0
  %2015 = vmatprep.mubr.bf16.mxu0 %v1379
  %2016 = vmatmul.mubr.bf16.gmra.mxu0 %v1378
  %v2017 = vpop.f32.mrf.mxu0
  %v2018 = vadd.f32 %v1897, %v2017
  %v2019 = vpop.f32.mrf.mxu0
  %v2020 = vpop.f32.mrf.mxu0
  %v2021 = vadd.f32 %v1900, %v2020
  %v2022 = vpop.f32.mrf.mxu0
  %2023 = vmatprep.mubr.bf16.mxu0 %v1385
  %2024 = vmatmul.mubr.bf16.gmra.mxu0 %v1384
  %v2025 = vpop.f32.mrf.mxu0
  %v2026 = vadd.f32 %v1905, %v2025
  %v2027 = vpop.f32.mrf.mxu0
  %v2028 = vpop.f32.mrf.mxu0
  %v2029 = vadd.f32 %v1908, %v2028
  %v2030 = vpop.f32.mrf.mxu0
  %2031 = vdwg.mxu0
  %2032 = vmatprep.subr.bf16.mxu0 0
  %2033 = vmatpush1.bf16.msra.mxu0 %v1703
  %2034 = vmatprep.subr.bf16.mxu0 0
  %2035 = vmatpush1.bf16.msra.mxu0 %v1702
  %2036 = vmatprep.subr.bf16.mxu0 0
  %2037 = vmatpush1.bf16.msra.mxu0 %v1701
  %2038 = vmatprep.subr.bf16.mxu0 0
  %2039 = vmatpush1.bf16.msra.mxu0 %v1700
  %2040 = vmatprep.subr.bf16.mxu0 0
  %2041 = vmatpush1.bf16.msra.mxu0 %v1699
  %2042 = vmatprep.subr.bf16.mxu0 0
  %2043 = vmatpush1.bf16.msra.mxu0 %v1698
  %2044 = vmatprep.subr.bf16.mxu0 0
  %2045 = vmatpush1.bf16.msra.mxu0 %v1697
  %2046 = vmatprep.subr.bf16.mxu0 0
  %2047 = vmatpush1.bf16.msra.mxu0 %v1696
  %2048 = vmatprep.subr.bf16.mxu0 0
  %2049 = vmatpush2.bf16.msra.mxu0 0
  %2050 = vmatprep.subr.bf16.mxu0 0
  %2051 = vmatpush2.bf16.msra.mxu0 0
  %2052 = vmatprep.subr.bf16.mxu0 0
  %2053 = vmatpush2.bf16.msra.mxu0 %v1709
  %2054 = vmatprep.subr.bf16.mxu0 0
  %2055 = vmatpush2.bf16.msra.mxu0 %v1708
  %2056 = vmatprep.subr.bf16.mxu0 0
  %2057 = vmatpush2.bf16.msra.mxu0 %v1707
  %2058 = vmatprep.subr.bf16.mxu0 0
  %2059 = vmatpush2.bf16.msra.mxu0 %v1706
  %2060 = vmatprep.subr.bf16.mxu0 0
  %2061 = vmatpush2.bf16.msra.mxu0 %v1705
  %2062 = vmatprep.subr.bf16.mxu0 0
  %2063 = vmatpush2.bf16.msra.mxu0 %v1704
  %2064 = vmatprep.mubr.bf16.mxu0 %v1758
  %2065 = vmatmul.mubr.bf16.gmra.mxu0 %v1326
  %v2066 = vpop.f32.mrf.mxu0
  %v2067 = vadd.f32 %v1946, %v2066
  %v2068 = vpop.f32.mrf.mxu0
  %v2069 = vpop.f32.mrf.mxu0
  %v2070 = vadd.f32 %v1949, %v2069
  %v2071 = vpop.f32.mrf.mxu0
  %2072 = vmatprep.mubr.bf16.mxu0 %v1761
  %2073 = vmatmul.mubr.bf16.gmra.mxu0 %v1332
  %v2074 = vpop.f32.mrf.mxu0
  %v2075 = vadd.f32 %v1954, %v2074
  %v2076 = vpop.f32.mrf.mxu0
  %v2077 = vpop.f32.mrf.mxu0
  %v2078 = vadd.f32 %v1957, %v2077
  %v2079 = vpop.f32.mrf.mxu0
  %2080 = vmatprep.mubr.bf16.mxu0 %v1764
  %2081 = vmatmul.mubr.bf16.gmra.mxu0 %v1338
  %v2082 = vpop.f32.mrf.mxu0
  %v2083 = vadd.f32 %v1962, %v2082
  %v2084 = vpop.f32.mrf.mxu0
  %v2085 = vpop.f32.mrf.mxu0
  %v2086 = vadd.f32 %v1965, %v2085
  %v2087 = vpop.f32.mrf.mxu0
  %2088 = vmatprep.mubr.bf16.mxu0 %v1767
  %2089 = vmatmul.mubr.bf16.gmra.mxu0 %v1344
  %v2090 = vpop.f32.mrf.mxu0
  %v2091 = vadd.f32 %v1970, %v2090
  %v2092 = vpop.f32.mrf.mxu0
  %v2093 = vpop.f32.mrf.mxu0
  %v2094 = vadd.f32 %v1973, %v2093
  %v2095 = vpop.f32.mrf.mxu0
  %2096 = vmatprep.mubr.bf16.mxu0 %v1770
  %2097 = vmatmul.mubr.bf16.gmra.mxu0 %v1350
  %v2098 = vpop.f32.mrf.mxu0
  %v2099 = vadd.f32 %v1978, %v2098
  %v2100 = vpop.f32.mrf.mxu0
  %v2101 = vpop.f32.mrf.mxu0
  %v2102 = vadd.f32 %v1981, %v2101
  %v2103 = vpop.f32.mrf.mxu0
  %2104 = vmatprep.mubr.bf16.mxu0 %v1773
  %2105 = vmatmul.mubr.bf16.gmra.mxu0 %v1356
  %v2106 = vpop.f32.mrf.mxu0
  %v2107 = vadd.f32 %v1986, %v2106
  %v2108 = vpop.f32.mrf.mxu0
  %v2109 = vpop.f32.mrf.mxu0
  %v2110 = vadd.f32 %v1989, %v2109
  %v2111 = vpop.f32.mrf.mxu0
  %2112 = vmatprep.mubr.bf16.mxu0 %v1776
  %2113 = vmatmul.mubr.bf16.gmra.mxu0 %v1362
  %v2114 = vpop.f32.mrf.mxu0
  %v2115 = vadd.f32 %v1994, %v2114
  %v2116 = vpop.f32.mrf.mxu0
  %v2117 = vpop.f32.mrf.mxu0
  %v2118 = vadd.f32 %v1997, %v2117
  %v2119 = vpop.f32.mrf.mxu0
  %2120 = vmatprep.mubr.bf16.mxu0 %v1779
  %2121 = vmatmul.mubr.bf16.gmra.mxu0 %v1368
  %v2122 = vpop.f32.mrf.mxu0
  %v2123 = vadd.f32 %v2002, %v2122
  %v2124 = vpop.f32.mrf.mxu0
  %v2125 = vpop.f32.mrf.mxu0
  %v2126 = vadd.f32 %v2005, %v2125
  %v2127 = vpop.f32.mrf.mxu0
  %2128 = vmatprep.mubr.bf16.mxu0 %v1782
  %2129 = vmatmul.mubr.bf16.gmra.mxu0 %v1374
  %v2130 = vpop.f32.mrf.mxu0
  %v2131 = vadd.f32 %v2010, %v2130
  %v2132 = vpop.f32.mrf.mxu0
  %v2133 = vpop.f32.mrf.mxu0
  %v2134 = vadd.f32 %v2013, %v2133
  %v2135 = vpop.f32.mrf.mxu0
  %2136 = vmatprep.mubr.bf16.mxu0 %v1785
  %2137 = vmatmul.mubr.bf16.gmra.mxu0 %v1380
  %v2138 = vpop.f32.mrf.mxu0
  %v2139 = vadd.f32 %v2018, %v2138
  %v2140 = vpop.f32.mrf.mxu0
  %v2141 = vpop.f32.mrf.mxu0
  %v2142 = vadd.f32 %v2021, %v2141
  %v2143 = vpop.f32.mrf.mxu0
  %2144 = vmatprep.mubr.bf16.mxu0 %v1788
  %2145 = vmatmul.mubr.bf16.gmra.mxu0 %v1386
  %v2146 = vpop.f32.mrf.mxu0
  %v2147 = vadd.f32 %v2026, %v2146
  %v2148 = vpop.f32.mrf.mxu0
  %v2149 = vpop.f32.mrf.mxu0
  %v2150 = vadd.f32 %v2029, %v2149
  %v2151 = vpop.f32.mrf.mxu0
  %2152 = vdwg.mxu0
  %vm2175 = vcmask 1046528
  %v2176 = vrot.slane %v2067, 1
  %v2177 = vrot.slane %v2070, 1
  %v2178 = vsel %vm2175, %v2176, %v2177
  %v2179 = vrot.slane %v2075, 1
  %v2180 = vsel %vm2175, %v2177, %v2179
  %v2181 = vrot.slane %v2078, 1
  %v2182 = vsel %vm2175, %v2179, %v2181
  %v2183 = vrot.slane %v2083, 1
  %v2184 = vsel %vm2175, %v2181, %v2183
  %v2185 = vrot.slane %v2086, 1
  %v2186 = vsel %vm2175, %v2183, %v2185
  %v2187 = vrot.slane %v2091, 1
  %v2188 = vsel %vm2175, %v2185, %v2187
  %v2189 = vrot.slane %v2094, 1
  %v2190 = vsel %vm2175, %v2187, %v2189
  %v2191 = vrot.slane %v2099, 1
  %v2192 = vsel %vm2175, %v2189, %v2191
  %v2193 = vrot.slane %v2102, 1
  %v2194 = vsel %vm2175, %v2191, %v2193
  %v2195 = vrot.slane %v2107, 1
  %v2196 = vsel %vm2175, %v2193, %v2195
  %v2197 = vrot.slane %v2110, 1
  %v2198 = vsel %vm2175, %v2195, %v2197
  %v2199 = vrot.slane %v2115, 1
  %v2200 = vsel %vm2175, %v2197, %v2199
  %v2201 = vrot.slane %v2118, 1
  %v2202 = vsel %vm2175, %v2199, %v2201
  %v2203 = vrot.slane %v2123, 1
  %v2204 = vsel %vm2175, %v2201, %v2203
  %v2205 = vrot.slane %v2126, 1
  %v2206 = vsel %vm2175, %v2203, %v2205
  %v2207 = vrot.slane %v2131, 1
  %v2208 = vsel %vm2175, %v2205, %v2207
  %v2209 = vrot.slane %v2134, 1
  %v2210 = vsel %vm2175, %v2207, %v2209
  %v2211 = vrot.slane %v2139, 1
  %v2212 = vsel %vm2175, %v2209, %v2211
  %v2213 = vrot.slane %v2142, 1
  %v2214 = vsel %vm2175, %v2211, %v2213
  %v2215 = vrot.slane %v2147, 1
  %v2216 = vsel %vm2175, %v2213, %v2215
  %v2217 = vrot.slane %v2150, 1
  %v2218 = vsel %vm2175, %v2215, %v2217
  %2219 = vrot.lane.b32.xlu0 %v2178, 112
  %v2220 = vpop.permute.xlu0 %2219
  %2221 = vrot.lane.b32.xlu0 %v2180, 112
  %v2222 = vpop.permute.xlu0 %2221
  %2223 = vrot.lane.b32.xlu0 %v2182, 112
  %v2224 = vpop.permute.xlu0 %2223
  %2225 = vrot.lane.b32.xlu0 %v2184, 112
  %v2226 = vpop.permute.xlu0 %2225
  %2227 = vrot.lane.b32.xlu0 %v2186, 112
  %v2228 = vpop.permute.xlu0 %2227
  %2229 = vrot.lane.b32.xlu0 %v2188, 112
  %v2230 = vpop.permute.xlu0 %2229
  %2231 = vrot.lane.b32.xlu0 %v2190, 112
  %v2232 = vpop.permute.xlu0 %2231
  %2233 = vrot.lane.b32.xlu0 %v2192, 112
  %v2234 = vpop.permute.xlu0 %2233
  %2235 = vrot.lane.b32.xlu0 %v2194, 112
  %v2236 = vpop.permute.xlu0 %2235
  %2237 = vrot.lane.b32.xlu0 %v2196, 112
  %v2238 = vpop.permute.xlu0 %2237
  %2239 = vrot.lane.b32.xlu0 %v2198, 112
  %v2240 = vpop.permute.xlu0 %2239
  %2241 = vrot.lane.b32.xlu0 %v2200, 112
  %v2242 = vpop.permute.xlu0 %2241
  %2243 = vrot.lane.b32.xlu0 %v2202, 112
  %v2244 = vpop.permute.xlu0 %2243
  %2245 = vrot.lane.b32.xlu0 %v2204, 112
  %v2246 = vpop.permute.xlu0 %2245
  %2247 = vrot.lane.b32.xlu0 %v2206, 112
  %v2248 = vpop.permute.xlu0 %2247
  %2249 = vrot.lane.b32.xlu0 %v2208, 112
  %v2250 = vpop.permute.xlu0 %2249
  %2251 = vrot.lane.b32.xlu0 %v2210, 112
  %v2252 = vpop.permute.xlu0 %2251
  %2253 = vrot.lane.b32.xlu0 %v2212, 112
  %v2254 = vpop.permute.xlu0 %2253
  %2255 = vrot.lane.b32.xlu0 %v2214, 112
  %v2256 = vpop.permute.xlu0 %2255
  %2257 = vrot.lane.b32.xlu0 %v2216, 112
  %v2258 = vpop.permute.xlu0 %2257
  %2259 = vrot.lane.b32.xlu0 %v2218, 112
  %v2260 = vpop.permute.xlu0 %2259
  %2261 = vrot.lane.b32.xlu0 %v2217, 112
  %v2262 = vpop.permute.xlu0 %2261
  %v2285 = vadd.f32 %v2067, %v2220
  %v2286 = vadd.f32 %v2070, %v2222
  %v2287 = vadd.f32 %v2075, %v2224
  %v2288 = vadd.f32 %v2078, %v2226
  %v2289 = vadd.f32 %v2083, %v2228
  %v2290 = vadd.f32 %v2086, %v2230
  %v2291 = vadd.f32 %v2091, %v2232
  %v2292 = vadd.f32 %v2094, %v2234
  %v2293 = vadd.f32 %v2099, %v2236
  %v2294 = vadd.f32 %v2102, %v2238
  %v2295 = vadd.f32 %v2107, %v2240
  %v2296 = vadd.f32 %v2110, %v2242
  %v2297 = vadd.f32 %v2115, %v2244
  %v2298 = vadd.f32 %v2118, %v2246
  %v2299 = vadd.f32 %v2123, %v2248
  %v2300 = vadd.f32 %v2126, %v2250
  %v2301 = vadd.f32 %v2131, %v2252
  %v2302 = vadd.f32 %v2134, %v2254
  %v2303 = vadd.f32 %v2139, %v2256
  %v2304 = vadd.f32 %v2142, %v2258
  %v2305 = vadd.f32 %v2147, %v2260
  %v2306 = vadd.f32 %v2150, %v2262
  %v2307 = vld [vmem:[%s4] sm:$0x1]
  %v2309 = vlaneseq
  %v2310 = vshrl.u32 %v2309, 7
  %v2311 = vsub.s32 0, %v2310
  %v2312 = vrot.slane %v2307, %v2311
  %v2314 = vadd.f32 %v2285, %v2312
  %v2315 = vadd.f32 %v2286, %v2312
  %v2316 = vadd.f32 %v2287, %v2312
  %v2317 = vadd.f32 %v2288, %v2312
  %v2318 = vadd.f32 %v2289, %v2312
  %v2319 = vadd.f32 %v2290, %v2312
  %v2320 = vadd.f32 %v2291, %v2312
  %v2321 = vadd.f32 %v2292, %v2312
  %v2322 = vadd.f32 %v2293, %v2312
  %v2323 = vadd.f32 %v2294, %v2312
  %v2324 = vadd.f32 %v2295, %v2312
  %v2325 = vadd.f32 %v2296, %v2312
  %v2326 = vadd.f32 %v2297, %v2312
  %v2327 = vadd.f32 %v2298, %v2312
  %v2328 = vadd.f32 %v2299, %v2312
  %v2329 = vadd.f32 %v2300, %v2312
  %v2330 = vadd.f32 %v2301, %v2312
  %v2331 = vadd.f32 %v2302, %v2312
  %v2332 = vadd.f32 %v2303, %v2312
  %v2333 = vadd.f32 %v2304, %v2312
  %v2334 = vadd.f32 %v2305, %v2312
  %v2335 = vadd.f32 %v2306, %v2312
  %v2336 = vmax.f32 %v2314, 0.0
  %v2337 = vmax.f32 %v2315, 0.0
  %v2338 = vmax.f32 %v2316, 0.0
  %v2339 = vmax.f32 %v2317, 0.0
  %v2340 = vmax.f32 %v2318, 0.0
  %v2341 = vmax.f32 %v2319, 0.0
  %v2342 = vmax.f32 %v2320, 0.0
  %v2343 = vmax.f32 %v2321, 0.0
  %v2344 = vmax.f32 %v2322, 0.0
  %v2345 = vmax.f32 %v2323, 0.0
  %v2346 = vmax.f32 %v2324, 0.0
  %v2347 = vmax.f32 %v2325, 0.0
  %v2348 = vmax.f32 %v2326, 0.0
  %v2349 = vmax.f32 %v2327, 0.0
  %v2350 = vmax.f32 %v2328, 0.0
  %v2351 = vmax.f32 %v2329, 0.0
  %v2352 = vmax.f32 %v2330, 0.0
  %v2353 = vmax.f32 %v2331, 0.0
  %v2354 = vmax.f32 %v2332, 0.0
  %v2355 = vmax.f32 %v2333, 0.0
  %v2356 = vmax.f32 %v2334, 0.0
  %v2357 = vmax.f32 %v2335, 0.0
  %vm2358 = vcmask 130048
  %2359 = vst.msk [vmem:[%s5] sm:$0xff] %vm2358, %v2336
  %2360 = vst.msk [vmem:[%s5 + $0x8] sm:$0xff] %vm2358, %v2337
  %2361 = vst.msk [vmem:[%s5 + $0x10] sm:$0xff] %vm2358, %v2338
  %2362 = vst.msk [vmem:[%s5 + $0x18] sm:$0xff] %vm2358, %v2339
  %2363 = vst.msk [vmem:[%s5 + $0x20] sm:$0xff] %vm2358, %v2340
  %2364 = vst.msk [vmem:[%s5 + $0x28] sm:$0xff] %vm2358, %v2341
  %2365 = vst.msk [vmem:[%s5 + $0x30] sm:$0xff] %vm2358, %v2342
  %2366 = vst.msk [vmem:[%s5 + $0x38] sm:$0xff] %vm2358, %v2343
  %2367 = vst.msk [vmem:[%s5 + $0x40] sm:$0xff] %vm2358, %v2344
  %2368 = vst.msk [vmem:[%s5 + $0x48] sm:$0xff] %vm2358, %v2345
  %vm2369 = vcmask 123904
  %2370 = vst.msk [vmem:[%s5 + $0x50] sm:$0x3] %vm2369, %v2346
  %2382 = vrot.lane.b32.xlu0 %v2347, 16
  %v2383 = vpop.permute.xlu0 %2382
  %2384 = vrot.lane.b32.xlu0 %v2348, 16
  %v2385 = vpop.permute.xlu0 %2384
  %2386 = vrot.lane.b32.xlu0 %v2349, 16
  %v2387 = vpop.permute.xlu0 %2386
  %2388 = vrot.lane.b32.xlu0 %v2350, 16
  %v2389 = vpop.permute.xlu0 %2388
  %2390 = vrot.lane.b32.xlu0 %v2351, 16
  %v2391 = vpop.permute.xlu0 %2390
  %2392 = vrot.lane.b32.xlu0 %v2352, 16
  %v2393 = vpop.permute.xlu0 %2392
  %2394 = vrot.lane.b32.xlu0 %v2353, 16
  %v2395 = vpop.permute.xlu0 %2394
  %2396 = vrot.lane.b32.xlu0 %v2354, 16
  %v2397 = vpop.permute.xlu0 %2396
  %2398 = vrot.lane.b32.xlu0 %v2355, 16
  %v2399 = vpop.permute.xlu0 %2398
  %2400 = vrot.lane.b32.xlu0 %v2356, 16
  %v2401 = vpop.permute.xlu0 %2400
  %2402 = vrot.lane.b32.xlu0 %v2357, 16
  %v2403 = vpop.permute.xlu0 %2402
  %vm2415 = vcmask 261248
  %2416 = vst.msk [vmem:[%s5] sm:$0xff] %vm2415, %v2383
  %2417 = vst.msk [vmem:[%s5 + $0x8] sm:$0xff] %vm2415, %v2385
  %2418 = vst.msk [vmem:[%s5 + $0x10] sm:$0xff] %vm2415, %v2387
  %2419 = vst.msk [vmem:[%s5 + $0x18] sm:$0xff] %vm2415, %v2389
  %2420 = vst.msk [vmem:[%s5 + $0x20] sm:$0xff] %vm2415, %v2391
  %2421 = vst.msk [vmem:[%s5 + $0x28] sm:$0xff] %vm2415, %v2393
  %2422 = vst.msk [vmem:[%s5 + $0x30] sm:$0xff] %vm2415, %v2395
  %2423 = vst.msk [vmem:[%s5 + $0x38] sm:$0xff] %vm2415, %v2397
  %2424 = vst.msk [vmem:[%s5 + $0x40] sm:$0xff] %vm2415, %v2399
  %2425 = vst.msk [vmem:[%s5 + $0x48] sm:$0xff] %vm2415, %v2401
  %vm2426 = vcmask 255104
  %2427 = vst.msk [vmem:[%s5 + $0x50] sm:$0x3] %vm2426, %v2403
  // Predicated region
  $region22: #{forward.1} parent=0 // pred_check
    _
  $region23: #{forward.1} parent=0 // pred_check_branch
    %2429 = sbr.rel (0) target = $region25
  $region24: #{forward.1} parent=0 // pred_region
    _
  $region25: #{forward.1} parent=0 // pred_fallthru
    _
  // Predicated region
  $region26: #{forward.1} parent=0 // pred_check
    _
  $region27: #{forward.1} parent=0 // pred_check_branch
    %2431 = sbr.rel (0) target = $region29
  $region28: #{forward.1} parent=0 // pred_region
    _
  $region29: #{forward.1} parent=0 // pred_fallthru
    _

</llo_original>
